<compile_context>
chip_gen: v5e
topology: v5e:2x2
jax: 0.10.0
libtpu: 0.0.40
codegen_flags: <defaults>
</compile_context>

<pallas_src>
import math

import jax
import jax.numpy as jnp
from jax.experimental import pallas as pl
from jax.experimental.pallas import tpu as pltpu

# ----------------------------- configuration -------------------------------
HIDDEN = 32           # config.hidden_size
NUM_HEADS = 4         # config.transformer['num_heads']
HEAD_DIM = HIDDEN // NUM_HEADS
MLP_DIM = 64          # config.transformer['mlp_dim']
NUM_LAYERS = 2        # config.transformer['num_layers']
PATCH = 4             # config.patches['size']
IMG = 16              # img_size
IN_CH = 4             # in_channels
N_PATCHES = (IMG // PATCH) * (IMG // PATCH)   # 16
PATCH_DIM = IN_CH * PATCH * PATCH             # 64
EPS = 1e-6


# ------------------------------ kernel helpers ------------------------------
def _layernorm(x, g, b):
    # PyTorch LayerNorm: biased variance over last dim, eps inside rsqrt.
    mu = jnp.mean(x, axis=-1, keepdims=True)
    xc = x - mu
    var = jnp.mean(xc * xc, axis=-1, keepdims=True)
    return xc * jax.lax.rsqrt(var + EPS) * g + b


# ------------------------------ fused Pallas kernel --------------------------
def _fused_forward_kernel(patch_ref, pw_ref, pb_ref, pos_ref,
                          ln_ref, wqkvo_ref, bqkvo_ref,
                          wf1_ref, bf1_ref, wf2_ref, bf2_ref,
                          encln_ref, out_ref):
    D = HIDDEN
    HD = HEAD_DIM

    # --- patch embedding + positional embedding: one (N,P)x(P,D) MXU pass ---
    x = jnp.dot(patch_ref[0], pw_ref[...],
                preferred_element_type=jnp.float32) + pb_ref[...]
    x = x + pos_ref[0]                                   # (N, D)

    # --- NUM_LAYERS transformer blocks, statically unrolled, weights resident
    for l in range(NUM_LAYERS):
        ln = ln_ref[l]                                   # (4, D): g1,b1,g2,b2
        w_qkvo = wqkvo_ref[l]                            # (D, 4D) lane-dense
        b_qkvo = bqkvo_ref[l]                            # (1, 4D)

        h = x
        xn = _layernorm(x, ln[0:1, :], ln[1:2, :])

        # Single lane-dense projection producing [q|k|v|(unused o-cols)];
        # the 1/sqrt(head_dim) scale is pre-folded into the q columns/bias.
        qkv = jnp.dot(xn, w_qkvo,
                      preferred_element_type=jnp.float32) + b_qkvo   # (N, 4D)

        # Accumulate the output projection head-by-head (residual + out bias
        # first); avoids any lane-axis concatenation of per-head contexts.
        acc = h + b_qkvo[:, 3 * D:]                      # (N, D)
        for hd in range(NUM_HEADS):                      # static unrolled
            lo = hd * HD
            qh = qkv[:, lo:lo + HD]                      # (N, HD)
            kh = qkv[:, D + lo:D + lo + HD]              # (N, HD)
            vh = qkv[:, 2 * D + lo:2 * D + lo + HD]      # (N, HD)
            # q @ k^T without materializing a transpose: contract dim 1 of both.
            s = jax.lax.dot_general(qh, kh, (((1,), (1,)), ((), ())),
                                    preferred_element_type=jnp.float32)
            s = s - jnp.max(s, axis=-1, keepdims=True)
            p = jnp.exp(s)
            # NOTE: pl.reciprocal(..., approx=True) would move this divide to
            # the EUP slot, but the approximate path costs ~1e-4 accuracy; we
            # keep the exact divide so the tightened 1e-4 check is meaningful.
            p = p / jnp.sum(p, axis=-1, keepdims=True)
            ctx_h = jnp.dot(p, vh, preferred_element_type=jnp.float32)  # (N,HD)
            # fold this head's contribution straight into the out projection
            acc = acc + jnp.dot(ctx_h, w_qkvo[lo:lo + HD, 3 * D:],
                                preferred_element_type=jnp.float32)
        x = acc                                          # attn out + residual 1

        h2 = x
        xn2 = _layernorm(x, ln[2:3, :], ln[3:4, :])
        m = jnp.dot(xn2, wf1_ref[l],
                    preferred_element_type=jnp.float32) + bf1_ref[l]
        m = jnp.maximum(m, 0.0)                          # ReLU
        m = jnp.dot(m, wf2_ref[l],
                    preferred_element_type=jnp.float32) + bf2_ref[l]
        x = m + h2                                       # residual 2

    # --- final encoder LayerNorm ---
    out_ref[0] = _layernorm(x, encln_ref[0:1, :], encln_ref[1:2, :])


# ------------------------------ pallas_call wrapper --------------------------
def _resident(shape):
    """Full-array block, constant index map => loaded once, VMEM-resident."""
    return pl.BlockSpec(shape, lambda i: (0,) * len(shape))


def transformer_forward(q_ids, packed):
    """Encoder.forward(hidden_states, kv=None, mask=None) on patch embeddings.

    Returns (encoded, attn_weights); vis=False so attn_weights is empty.
    """
    patches = extract_patches(q_ids)                     # (B, N, P)
    B, N, P = patches.shape
    D, M, L = HIDDEN, MLP_DIM, NUM_LAYERS

    encoded = pl.pallas_call(
        _fused_forward_kernel,
        out_shape=jax.ShapeDtypeStruct((B, N, D), jnp.float32),
        grid=(B,),
        in_specs=[
            pl.BlockSpec((1, N, P), lambda i: (i, 0, 0)),   # patches (per batch)
            _resident((P, D)),                              # patch_w
            _resident((1, D)),                              # patch_b
            _resident((1, N, D)),                           # pos_emb
            _resident((L, 4, D)),                           # ln params
            _resident((L, D, 4 * D)),                       # packed wq|wk|wv|wo
            _resident((L, 1, 4 * D)),                       # packed biases
            _resident((L, D, M)),                           # fc1 w
            _resident((L, 1, M)),                           # fc1 b
            _resident((L, M, D)),                           # fc2 w
            _resident((L, 1, D)),                           # fc2 b
            _resident((2, D)),                              # encoder_norm g,b
        ],
        out_specs=pl.BlockSpec((1, N, D), lambda i: (i, 0, 0)),
        # parallel batch axis: both TensorCores on v7x; cheap 2-step loop on
        # v5e/v6e (weights are not re-fetched: constant index maps).
        compiler_params=pltpu.CompilerParams(dimension_semantics=("parallel",)),
    )(patches, packed["patch_w"], packed["patch_b"], packed["pos_emb"],
      packed["ln"], packed["w_qkvo"], packed["b_qkvo"],
      packed["w_fc1"], packed["b_fc1"], packed["w_fc2"], packed["b_fc2"],
      packed["enc_ln"])

    attn_weights = []   # vis=False -> no attention maps returned
    return encoded, attn_weights


# ------------------------------ glue / packing --------------------------------
def extract_patches(x_nchw):
    # NCHW -> (B, n_patches, C*ph*pw); patch order row-major over the grid,
    # per-patch feature order (C, ph, pw) — matches Conv2d(kernel=stride=patch)
    # followed by flatten(2).transpose(-1,-2).
    B, C, H, W = x_nchw.shape
    gh, gw = H // PATCH, W // PATCH
    x = x_nchw.reshape(B, C, gh, PATCH, gw, PATCH)
    x = x.transpose(0, 2, 4, 1, 3, 5)
    return x.reshape(B, gh * gw, C * PATCH * PATCH)


def pack_params(params):
    """One-time repack of PyTorch-style params for the fused kernel.

    Stacks per-layer tensors along a leading layer dim, packs wq|wk|wv|wo
    column-wise into a lane-dense (D, 4D) matrix, and folds the
    1/sqrt(head_dim) attention scale into the query projection.
    """
    scale = 1.0 / math.sqrt(HEAD_DIM)
    ln, w_qkvo, b_qkvo, w_f1, b_f1, w_f2, b_f2 = [], [], [], [], [], [], []
    for p in params["layers"]:
        ln.append(jnp.concatenate(
            [p["ln1_g"], p["ln1_b"], p["ln2_g"], p["ln2_b"]], axis=0))     # (4,D)
        w_qkvo.append(jnp.concatenate(
            [p["wq"] * scale, p["wk"], p["wv"], p["wo"]], axis=1))         # (D,4D)
        b_qkvo.append(jnp.concatenate(
            [p["bq"] * scale, p["bk"], p["bv"], p["bo"]], axis=1))         # (1,4D)
        w_f1.append(p["wf1"]); b_f1.append(p["bf1"])
        w_f2.append(p["wf2"]); b_f2.append(p["bf2"])
    return {
        "patch_w": params["patch_w"],
        "patch_b": params["patch_b"],
        "pos_emb": params["pos_emb"],
        "ln": jnp.stack(ln),            # (L, 4, D)
        "w_qkvo": jnp.stack(w_qkvo),    # (L, D, 4D)
        "b_qkvo": jnp.stack(b_qkvo),    # (L, 1, 4D)
        "w_fc1": jnp.stack(w_f1),       # (L, D, MLP)
        "b_fc1": jnp.stack(b_f1),       # (L, 1, MLP)
        "w_fc2": jnp.stack(w_f2),       # (L, MLP, D)
        "b_fc2": jnp.stack(b_f2),       # (L, 1, D)
        "enc_ln": jnp.concatenate(
            [params["enc_ln_g"], params["enc_ln_b"]], axis=0),             # (2,D)
    }


# ------------------------------ reference (plain JAX) ------------------------
def _ref_forward(q_ids, params):
    patches = extract_patches(q_ids)
    h = patches @ params["patch_w"] + params["patch_b"] + params["pos_emb"]
    for p in params["layers"]:
        res = h
        xn = _layernorm(h, p["ln1_g"], p["ln1_b"])
        q = xn @ p["wq"] + p["bq"]
        k = xn @ p["wk"] + p["bk"]
        v = xn @ p["wv"] + p["bv"]
        B, N, _ = q.shape
        qh = q.reshape(B, N, NUM_HEADS, HEAD_DIM).transpose(0, 2, 1, 3)
        kh = k.reshape(B, N, NUM_HEADS, HEAD_DIM).transpose(0, 2, 1, 3)
        vh = v.reshape(B, N, NUM_HEADS, HEAD_DIM).transpose(0, 2, 1, 3)
        s = jnp.einsum("bhqd,bhkd->bhqk", qh, kh) / math.sqrt(HEAD_DIM)
        pr = jax.nn.softmax(s, axis=-1)
        ctx = jnp.einsum("bhqk,bhkd->bhqd", pr, vh)
        ctx = ctx.transpose(0, 2, 1, 3).reshape(B, N, HIDDEN)
        h = ctx @ p["wo"] + p["bo"] + res
        res = h
        xn = _layernorm(h, p["ln2_g"], p["ln2_b"])
        m = jnp.maximum(xn @ p["wf1"] + p["bf1"], 0.0) @ p["wf2"] + p["bf2"]
        h = m + res
    return _layernorm(h, params["enc_ln_g"], params["enc_ln_b"])


# ------------------------------ parameter init -------------------------------
def init_params(key):
    def nrm(k, shape, scale):
        return (scale * jax.random.normal(k, shape)).astype(jnp.float32)

    keys = jax.random.split(key, 4 + NUM_LAYERS)
    params = {
        "patch_w": nrm(keys[0], (PATCH_DIM, HIDDEN), 0.05),
        "patch_b": nrm(keys[1], (1, HIDDEN), 0.01),
        "pos_emb": nrm(keys[2], (1, N_PATCHES, HIDDEN), 0.02),
        "enc_ln_g": jnp.ones((1, HIDDEN), jnp.float32),
        "enc_ln_b": jnp.zeros((1, HIDDEN), jnp.float32),
        "layers": [],
    }
    for l in range(NUM_LAYERS):
        lk = jax.random.split(keys[4 + l], 12)
        params["layers"].append({
            "ln1_g": jnp.ones((1, HIDDEN), jnp.float32),
            "ln1_b": jnp.zeros((1, HIDDEN), jnp.float32),
            "wq": nrm(lk[0], (HIDDEN, HIDDEN), 0.05),
            "bq": nrm(lk[1], (1, HIDDEN), 0.01),
            "wk": nrm(lk[2], (HIDDEN, HIDDEN), 0.05),
            "bk": nrm(lk[3], (1, HIDDEN), 0.01),
            "wv": nrm(lk[4], (HIDDEN, HIDDEN), 0.05),
            "bv": nrm(lk[5], (1, HIDDEN), 0.01),
            "wo": nrm(lk[6], (HIDDEN, HIDDEN), 0.05),
            "bo": nrm(lk[7], (1, HIDDEN), 0.01),
            "ln2_g": jnp.ones((1, HIDDEN), jnp.float32),
            "ln2_b": jnp.zeros((1, HIDDEN), jnp.float32),
            "wf1": nrm(lk[8], (HIDDEN, MLP_DIM), 0.05),
            "bf1": nrm(lk[9], (1, MLP_DIM), 0.001),
            "wf2": nrm(lk[10], (MLP_DIM, HIDDEN), 0.05),
            "bf2": nrm(lk[11], (1, HIDDEN), 0.001),
        })
    return params


# ---------------------------------- main -------------------------------------
if __name__ == "__main__":
    key = jax.random.PRNGKey(0)
    k_params, k_x = jax.random.split(key)
    params = init_params(k_params)
    packed = pack_params(params)
    q_ids = jax.random.normal(k_x, (2, IN_CH, IMG, IMG), dtype=jnp.float32)

    encoded, attn_weights = transformer_forward(q_ids, packed)
    encoded = jax.block_until_ready(encoded)

    assert encoded.shape == (2, N_PATCHES, HIDDEN), encoded.shape
    assert bool(jnp.all(jnp.isfinite(encoded)))

    ref = jax.block_until_ready(_ref_forward(q_ids, params))
    max_diff = float(jnp.max(jnp.abs(encoded - ref)))
    # all-f32 path with exact softmax divide -> expect ~1e-6; tightened check.
    assert max_diff < 1e-4, f"mismatch vs reference: {max_diff}"

    print("KERNEL_OK")
</pallas_src>

<mosaic_0001>
module attributes {stable_mosaic.version = 11 : i64} {
  func.func @_fused_forward_kernel(%arg0: i32, %arg1: memref<1x16x64xf32, #tpu.memory_space<vmem>>, %arg2: memref<64x32xf32, #tpu.memory_space<vmem>>, %arg3: memref<1x32xf32, #tpu.memory_space<vmem>>, %arg4: memref<1x16x32xf32, #tpu.memory_space<vmem>>, %arg5: memref<2x4x32xf32, #tpu.memory_space<vmem>>, %arg6: memref<2x32x128xf32, #tpu.memory_space<vmem>>, %arg7: memref<2x1x128xf32, #tpu.memory_space<vmem>>, %arg8: memref<2x32x64xf32, #tpu.memory_space<vmem>>, %arg9: memref<2x1x64xf32, #tpu.memory_space<vmem>>, %arg10: memref<2x64x32xf32, #tpu.memory_space<vmem>>, %arg11: memref<2x1x32xf32, #tpu.memory_space<vmem>>, %arg12: memref<2x32xf32, #tpu.memory_space<vmem>>, %arg13: memref<1x16x32xf32, #tpu.memory_space<vmem>>) attributes {dimension_semantics = [#tpu.dimension_semantics<parallel>], iteration_bounds = array<i64: 2>, scalar_prefetch = 0 : i64, scratch_operands = 0 : i64, tpu.core_type = #tpu.core_type<tc>, window_params = [{transform_indices = @transform_0, window_bounds = array<i64: 1, 16, 64>}, {pipeline_mode = #tpu.pipeline_mode<synchronous>, transform_indices = @transform_1, window_bounds = array<i64: 64, 32>}, {pipeline_mode = #tpu.pipeline_mode<synchronous>, transform_indices = @transform_2, window_bounds = array<i64: 1, 32>}, {pipeline_mode = #tpu.pipeline_mode<synchronous>, transform_indices = @transform_3, window_bounds = array<i64: 1, 16, 32>}, {pipeline_mode = #tpu.pipeline_mode<synchronous>, transform_indices = @transform_4, window_bounds = array<i64: 2, 4, 32>}, {pipeline_mode = #tpu.pipeline_mode<synchronous>, transform_indices = @transform_5, window_bounds = array<i64: 2, 32, 128>}, {pipeline_mode = #tpu.pipeline_mode<synchronous>, transform_indices = @transform_6, window_bounds = array<i64: 2, 1, 128>}, {pipeline_mode = #tpu.pipeline_mode<synchronous>, transform_indices = @transform_7, window_bounds = array<i64: 2, 32, 64>}, {pipeline_mode = #tpu.pipeline_mode<synchronous>, transform_indices = @transform_8, window_bounds = array<i64: 2, 1, 64>}, {pipeline_mode = #tpu.pipeline_mode<synchronous>, transform_indices = @transform_9, window_bounds = array<i64: 2, 64, 32>}, {pipeline_mode = #tpu.pipeline_mode<synchronous>, transform_indices = @transform_10, window_bounds = array<i64: 2, 1, 32>}, {pipeline_mode = #tpu.pipeline_mode<synchronous>, transform_indices = @transform_11, window_bounds = array<i64: 2, 32>}, {transform_indices = @transform_12, window_bounds = array<i64: 1, 16, 32>}]} {
    %c0 = arith.constant 0 : index
    %c0_0 = arith.constant 0 : index
    %c0_1 = arith.constant 0 : index
    %0 = vector.load %arg1[%c0, %c0_0, %c0_1] : memref<1x16x64xf32, #tpu.memory_space<vmem>>, vector<1x16x64xf32>
    %1 = vector.shape_cast %0 : vector<1x16x64xf32> to vector<16x64xf32>
    %c0_2 = arith.constant 0 : index
    %c0_3 = arith.constant 0 : index
    %2 = vector.load %arg2[%c0_2, %c0_3] : memref<64x32xf32, #tpu.memory_space<vmem>>, vector<64x32xf32>
    %cst = arith.constant dense<0.000000e+00> : vector<16x32xf32>
    %3 = tpu.matmul %1, %2, %cst {dimension_numbers = #tpu.dot_dimension_numbers<[1], [0], [0], [1], [0, 0, 1, 1], [], []>} : vector<16x64xf32>, vector<64x32xf32>, vector<16x32xf32> -> vector<16x32xf32>
    %c0_4 = arith.constant 0 : index
    %c0_5 = arith.constant 0 : index
    %4 = vector.load %arg3[%c0_4, %c0_5] : memref<1x32xf32, #tpu.memory_space<vmem>>, vector<1x32xf32>
    %5 = vector.broadcast %4 : vector<1x32xf32> to vector<16x32xf32>
    %6 = arith.addf %3, %5 : vector<16x32xf32>
    %c0_6 = arith.constant 0 : index
    %c0_7 = arith.constant 0 : index
    %c0_8 = arith.constant 0 : index
    %7 = vector.load %arg4[%c0_6, %c0_7, %c0_8] : memref<1x16x32xf32, #tpu.memory_space<vmem>>, vector<1x16x32xf32>
    %8 = vector.shape_cast %7 : vector<1x16x32xf32> to vector<16x32xf32>
    %9 = arith.addf %6, %8 : vector<16x32xf32>
    %c0_9 = arith.constant 0 : index
    %c0_10 = arith.constant 0 : index
    %c0_11 = arith.constant 0 : index
    %10 = vector.load %arg5[%c0_9, %c0_10, %c0_11] : memref<2x4x32xf32, #tpu.memory_space<vmem>>, vector<1x4x32xf32>
    %11 = vector.shape_cast %10 : vector<1x4x32xf32> to vector<4x32xf32>
    %c0_12 = arith.constant 0 : index
    %c0_13 = arith.constant 0 : index
    %c0_14 = arith.constant 0 : index
    %12 = vector.load %arg6[%c0_12, %c0_13, %c0_14] : memref<2x32x128xf32, #tpu.memory_space<vmem>>, vector<1x32x128xf32>
    %13 = vector.shape_cast %12 : vector<1x32x128xf32> to vector<32x128xf32>
    %c0_15 = arith.constant 0 : index
    %c0_16 = arith.constant 0 : index
    %c0_17 = arith.constant 0 : index
    %14 = vector.load %arg7[%c0_15, %c0_16, %c0_17] : memref<2x1x128xf32, #tpu.memory_space<vmem>>, vector<1x1x128xf32>
    %15 = vector.shape_cast %14 : vector<1x1x128xf32> to vector<1x128xf32>
    %16 = vector.extract_strided_slice %11 {offsets = [0, 0], sizes = [1, 32], strides = [1, 1]} : vector<4x32xf32> to vector<1x32xf32>
    %17 = vector.extract_strided_slice %11 {offsets = [1, 0], sizes = [1, 32], strides = [1, 1]} : vector<4x32xf32> to vector<1x32xf32>
    %cst_18 = arith.constant dense<0.000000e+00> : vector<16xf32>
    %18 = vector.multi_reduction <add>, %9, %cst_18 [1] : vector<16x32xf32> to vector<16xf32>
    %19 = vector.shape_cast %18 : vector<16xf32> to vector<16x1xf32>
    %cst_19 = arith.constant 3.200000e+01 : f32
    %20 = vector.broadcast %cst_19 : f32 to vector<16x1xf32>
    %21 = arith.divf %19, %20 : vector<16x1xf32>
    %22 = vector.broadcast %21 : vector<16x1xf32> to vector<16x32xf32>
    %23 = arith.subf %9, %22 : vector<16x32xf32>
    %24 = arith.mulf %23, %23 : vector<16x32xf32>
    %cst_20 = arith.constant dense<0.000000e+00> : vector<16xf32>
    %25 = vector.multi_reduction <add>, %24, %cst_20 [1] : vector<16x32xf32> to vector<16xf32>
    %26 = vector.shape_cast %25 : vector<16xf32> to vector<16x1xf32>
    %cst_21 = arith.constant 3.200000e+01 : f32
    %27 = vector.broadcast %cst_21 : f32 to vector<16x1xf32>
    %28 = arith.divf %26, %27 : vector<16x1xf32>
    %cst_22 = arith.constant 9.99999997E-7 : f32
    %29 = vector.broadcast %cst_22 : f32 to vector<16x1xf32>
    %30 = arith.addf %28, %29 : vector<16x1xf32>
    %31 = math.rsqrt %30 : vector<16x1xf32>
    %32 = vector.broadcast %31 : vector<16x1xf32> to vector<16x32xf32>
    %33 = arith.mulf %23, %32 : vector<16x32xf32>
    %34 = vector.broadcast %16 : vector<1x32xf32> to vector<16x32xf32>
    %35 = arith.mulf %33, %34 : vector<16x32xf32>
    %36 = vector.broadcast %17 : vector<1x32xf32> to vector<16x32xf32>
    %37 = arith.addf %35, %36 : vector<16x32xf32>
    %cst_23 = arith.constant dense<0.000000e+00> : vector<16x128xf32>
    %38 = tpu.matmul %37, %13, %cst_23 {dimension_numbers = #tpu.dot_dimension_numbers<[1], [0], [0], [1], [0, 0, 1, 1], [], []>} : vector<16x32xf32>, vector<32x128xf32>, vector<16x128xf32> -> vector<16x128xf32>
    %39 = vector.broadcast %15 : vector<1x128xf32> to vector<16x128xf32>
    %40 = arith.addf %38, %39 : vector<16x128xf32>
    %41 = vector.extract_strided_slice %15 {offsets = [0, 96], sizes = [1, 32], strides = [1, 1]} : vector<1x128xf32> to vector<1x32xf32>
    %42 = vector.broadcast %41 : vector<1x32xf32> to vector<16x32xf32>
    %43 = arith.addf %9, %42 : vector<16x32xf32>
    %44 = vector.extract_strided_slice %40 {offsets = [0, 0], sizes = [16, 8], strides = [1, 1]} : vector<16x128xf32> to vector<16x8xf32>
    %45 = vector.extract_strided_slice %40 {offsets = [0, 32], sizes = [16, 8], strides = [1, 1]} : vector<16x128xf32> to vector<16x8xf32>
    %46 = vector.extract_strided_slice %40 {offsets = [0, 64], sizes = [16, 8], strides = [1, 1]} : vector<16x128xf32> to vector<16x8xf32>
    %cst_24 = arith.constant dense<0.000000e+00> : vector<16x16xf32>
    %47 = tpu.matmul %44, %45, %cst_24 {dimension_numbers = #tpu.dot_dimension_numbers<[1], [1], [0], [0], [0, 0, 1, 0], [], []>} : vector<16x8xf32>, vector<16x8xf32>, vector<16x16xf32> -> vector<16x16xf32>
    %cst_25 = arith.constant dense<0xFF800000> : vector<16xf32>
    %48 = vector.multi_reduction <maximumf>, %47, %cst_25 [1] : vector<16x16xf32> to vector<16xf32>
    %49 = vector.shape_cast %48 : vector<16xf32> to vector<16x1xf32>
    %50 = vector.broadcast %49 : vector<16x1xf32> to vector<16x16xf32>
    %51 = arith.subf %47, %50 : vector<16x16xf32>
    %52 = math.exp %51 : vector<16x16xf32>
    %cst_26 = arith.constant dense<0.000000e+00> : vector<16xf32>
    %53 = vector.multi_reduction <add>, %52, %cst_26 [1] : vector<16x16xf32> to vector<16xf32>
    %54 = vector.shape_cast %53 : vector<16xf32> to vector<16x1xf32>
    %55 = vector.broadcast %54 : vector<16x1xf32> to vector<16x16xf32>
    %56 = arith.divf %52, %55 : vector<16x16xf32>
    %cst_27 = arith.constant dense<0.000000e+00> : vector<16x8xf32>
    %57 = tpu.matmul %56, %46, %cst_27 {dimension_numbers = #tpu.dot_dimension_numbers<[1], [0], [0], [1], [0, 0, 1, 1], [], []>} : vector<16x16xf32>, vector<16x8xf32>, vector<16x8xf32> -> vector<16x8xf32>
    %58 = vector.extract_strided_slice %13 {offsets = [0, 96], sizes = [8, 32], strides = [1, 1]} : vector<32x128xf32> to vector<8x32xf32>
    %cst_28 = arith.constant dense<0.000000e+00> : vector<16x32xf32>
    %59 = tpu.matmul %57, %58, %cst_28 {dimension_numbers = #tpu.dot_dimension_numbers<[1], [0], [0], [1], [0, 0, 1, 1], [], []>} : vector<16x8xf32>, vector<8x32xf32>, vector<16x32xf32> -> vector<16x32xf32>
    %60 = arith.addf %43, %59 : vector<16x32xf32>
    %61 = vector.extract_strided_slice %40 {offsets = [0, 8], sizes = [16, 8], strides = [1, 1]} : vector<16x128xf32> to vector<16x8xf32>
    %62 = vector.extract_strided_slice %40 {offsets = [0, 40], sizes = [16, 8], strides = [1, 1]} : vector<16x128xf32> to vector<16x8xf32>
    %63 = vector.extract_strided_slice %40 {offsets = [0, 72], sizes = [16, 8], strides = [1, 1]} : vector<16x128xf32> to vector<16x8xf32>
    %cst_29 = arith.constant dense<0.000000e+00> : vector<16x16xf32>
    %64 = tpu.matmul %61, %62, %cst_29 {dimension_numbers = #tpu.dot_dimension_numbers<[1], [1], [0], [0], [0, 0, 1, 0], [], []>} : vector<16x8xf32>, vector<16x8xf32>, vector<16x16xf32> -> vector<16x16xf32>
    %cst_30 = arith.constant dense<0xFF800000> : vector<16xf32>
    %65 = vector.multi_reduction <maximumf>, %64, %cst_30 [1] : vector<16x16xf32> to vector<16xf32>
    %66 = vector.shape_cast %65 : vector<16xf32> to vector<16x1xf32>
    %67 = vector.broadcast %66 : vector<16x1xf32> to vector<16x16xf32>
    %68 = arith.subf %64, %67 : vector<16x16xf32>
    %69 = math.exp %68 : vector<16x16xf32>
    %cst_31 = arith.constant dense<0.000000e+00> : vector<16xf32>
    %70 = vector.multi_reduction <add>, %69, %cst_31 [1] : vector<16x16xf32> to vector<16xf32>
    %71 = vector.shape_cast %70 : vector<16xf32> to vector<16x1xf32>
    %72 = vector.broadcast %71 : vector<16x1xf32> to vector<16x16xf32>
    %73 = arith.divf %69, %72 : vector<16x16xf32>
    %cst_32 = arith.constant dense<0.000000e+00> : vector<16x8xf32>
    %74 = tpu.matmul %73, %63, %cst_32 {dimension_numbers = #tpu.dot_dimension_numbers<[1], [0], [0], [1], [0, 0, 1, 1], [], []>} : vector<16x16xf32>, vector<16x8xf32>, vector<16x8xf32> -> vector<16x8xf32>
    %75 = vector.extract_strided_slice %13 {offsets = [8, 96], sizes = [8, 32], strides = [1, 1]} : vector<32x128xf32> to vector<8x32xf32>
    %cst_33 = arith.constant dense<0.000000e+00> : vector<16x32xf32>
    %76 = tpu.matmul %74, %75, %cst_33 {dimension_numbers = #tpu.dot_dimension_numbers<[1], [0], [0], [1], [0, 0, 1, 1], [], []>} : vector<16x8xf32>, vector<8x32xf32>, vector<16x32xf32> -> vector<16x32xf32>
    %77 = arith.addf %60, %76 : vector<16x32xf32>
    %78 = vector.extract_strided_slice %40 {offsets = [0, 16], sizes = [16, 8], strides = [1, 1]} : vector<16x128xf32> to vector<16x8xf32>
    %79 = vector.extract_strided_slice %40 {offsets = [0, 48], sizes = [16, 8], strides = [1, 1]} : vector<16x128xf32> to vector<16x8xf32>
    %80 = vector.extract_strided_slice %40 {offsets = [0, 80], sizes = [16, 8], strides = [1, 1]} : vector<16x128xf32> to vector<16x8xf32>
    %cst_34 = arith.constant dense<0.000000e+00> : vector<16x16xf32>
    %81 = tpu.matmul %78, %79, %cst_34 {dimension_numbers = #tpu.dot_dimension_numbers<[1], [1], [0], [0], [0, 0, 1, 0], [], []>} : vector<16x8xf32>, vector<16x8xf32>, vector<16x16xf32> -> vector<16x16xf32>
    %cst_35 = arith.constant dense<0xFF800000> : vector<16xf32>
    %82 = vector.multi_reduction <maximumf>, %81, %cst_35 [1] : vector<16x16xf32> to vector<16xf32>
    %83 = vector.shape_cast %82 : vector<16xf32> to vector<16x1xf32>
    %84 = vector.broadcast %83 : vector<16x1xf32> to vector<16x16xf32>
    %85 = arith.subf %81, %84 : vector<16x16xf32>
    %86 = math.exp %85 : vector<16x16xf32>
    %cst_36 = arith.constant dense<0.000000e+00> : vector<16xf32>
    %87 = vector.multi_reduction <add>, %86, %cst_36 [1] : vector<16x16xf32> to vector<16xf32>
    %88 = vector.shape_cast %87 : vector<16xf32> to vector<16x1xf32>
    %89 = vector.broadcast %88 : vector<16x1xf32> to vector<16x16xf32>
    %90 = arith.divf %86, %89 : vector<16x16xf32>
    %cst_37 = arith.constant dense<0.000000e+00> : vector<16x8xf32>
    %91 = tpu.matmul %90, %80, %cst_37 {dimension_numbers = #tpu.dot_dimension_numbers<[1], [0], [0], [1], [0, 0, 1, 1], [], []>} : vector<16x16xf32>, vector<16x8xf32>, vector<16x8xf32> -> vector<16x8xf32>
    %92 = vector.extract_strided_slice %13 {offsets = [16, 96], sizes = [8, 32], strides = [1, 1]} : vector<32x128xf32> to vector<8x32xf32>
    %cst_38 = arith.constant dense<0.000000e+00> : vector<16x32xf32>
    %93 = tpu.matmul %91, %92, %cst_38 {dimension_numbers = #tpu.dot_dimension_numbers<[1], [0], [0], [1], [0, 0, 1, 1], [], []>} : vector<16x8xf32>, vector<8x32xf32>, vector<16x32xf32> -> vector<16x32xf32>
    %94 = arith.addf %77, %93 : vector<16x32xf32>
    %95 = vector.extract_strided_slice %40 {offsets = [0, 24], sizes = [16, 8], strides = [1, 1]} : vector<16x128xf32> to vector<16x8xf32>
    %96 = vector.extract_strided_slice %40 {offsets = [0, 56], sizes = [16, 8], strides = [1, 1]} : vector<16x128xf32> to vector<16x8xf32>
    %97 = vector.extract_strided_slice %40 {offsets = [0, 88], sizes = [16, 8], strides = [1, 1]} : vector<16x128xf32> to vector<16x8xf32>
    %cst_39 = arith.constant dense<0.000000e+00> : vector<16x16xf32>
    %98 = tpu.matmul %95, %96, %cst_39 {dimension_numbers = #tpu.dot_dimension_numbers<[1], [1], [0], [0], [0, 0, 1, 0], [], []>} : vector<16x8xf32>, vector<16x8xf32>, vector<16x16xf32> -> vector<16x16xf32>
    %cst_40 = arith.constant dense<0xFF800000> : vector<16xf32>
    %99 = vector.multi_reduction <maximumf>, %98, %cst_40 [1] : vector<16x16xf32> to vector<16xf32>
    %100 = vector.shape_cast %99 : vector<16xf32> to vector<16x1xf32>
    %101 = vector.broadcast %100 : vector<16x1xf32> to vector<16x16xf32>
    %102 = arith.subf %98, %101 : vector<16x16xf32>
    %103 = math.exp %102 : vector<16x16xf32>
    %cst_41 = arith.constant dense<0.000000e+00> : vector<16xf32>
    %104 = vector.multi_reduction <add>, %103, %cst_41 [1] : vector<16x16xf32> to vector<16xf32>
    %105 = vector.shape_cast %104 : vector<16xf32> to vector<16x1xf32>
    %106 = vector.broadcast %105 : vector<16x1xf32> to vector<16x16xf32>
    %107 = arith.divf %103, %106 : vector<16x16xf32>
    %cst_42 = arith.constant dense<0.000000e+00> : vector<16x8xf32>
    %108 = tpu.matmul %107, %97, %cst_42 {dimension_numbers = #tpu.dot_dimension_numbers<[1], [0], [0], [1], [0, 0, 1, 1], [], []>} : vector<16x16xf32>, vector<16x8xf32>, vector<16x8xf32> -> vector<16x8xf32>
    %109 = vector.extract_strided_slice %13 {offsets = [24, 96], sizes = [8, 32], strides = [1, 1]} : vector<32x128xf32> to vector<8x32xf32>
    %cst_43 = arith.constant dense<0.000000e+00> : vector<16x32xf32>
    %110 = tpu.matmul %108, %109, %cst_43 {dimension_numbers = #tpu.dot_dimension_numbers<[1], [0], [0], [1], [0, 0, 1, 1], [], []>} : vector<16x8xf32>, vector<8x32xf32>, vector<16x32xf32> -> vector<16x32xf32>
    %111 = arith.addf %94, %110 : vector<16x32xf32>
    %112 = vector.extract_strided_slice %11 {offsets = [2, 0], sizes = [1, 32], strides = [1, 1]} : vector<4x32xf32> to vector<1x32xf32>
    %113 = vector.extract_strided_slice %11 {offsets = [3, 0], sizes = [1, 32], strides = [1, 1]} : vector<4x32xf32> to vector<1x32xf32>
    %cst_44 = arith.constant dense<0.000000e+00> : vector<16xf32>
    %114 = vector.multi_reduction <add>, %111, %cst_44 [1] : vector<16x32xf32> to vector<16xf32>
    %115 = vector.shape_cast %114 : vector<16xf32> to vector<16x1xf32>
    %cst_45 = arith.constant 3.200000e+01 : f32
    %116 = vector.broadcast %cst_45 : f32 to vector<16x1xf32>
    %117 = arith.divf %115, %116 : vector<16x1xf32>
    %118 = vector.broadcast %117 : vector<16x1xf32> to vector<16x32xf32>
    %119 = arith.subf %111, %118 : vector<16x32xf32>
    %120 = arith.mulf %119, %119 : vector<16x32xf32>
    %cst_46 = arith.constant dense<0.000000e+00> : vector<16xf32>
    %121 = vector.multi_reduction <add>, %120, %cst_46 [1] : vector<16x32xf32> to vector<16xf32>
    %122 = vector.shape_cast %121 : vector<16xf32> to vector<16x1xf32>
    %cst_47 = arith.constant 3.200000e+01 : f32
    %123 = vector.broadcast %cst_47 : f32 to vector<16x1xf32>
    %124 = arith.divf %122, %123 : vector<16x1xf32>
    %cst_48 = arith.constant 9.99999997E-7 : f32
    %125 = vector.broadcast %cst_48 : f32 to vector<16x1xf32>
    %126 = arith.addf %124, %125 : vector<16x1xf32>
    %127 = math.rsqrt %126 : vector<16x1xf32>
    %128 = vector.broadcast %127 : vector<16x1xf32> to vector<16x32xf32>
    %129 = arith.mulf %119, %128 : vector<16x32xf32>
    %130 = vector.broadcast %112 : vector<1x32xf32> to vector<16x32xf32>
    %131 = arith.mulf %129, %130 : vector<16x32xf32>
    %132 = vector.broadcast %113 : vector<1x32xf32> to vector<16x32xf32>
    %133 = arith.addf %131, %132 : vector<16x32xf32>
    %c0_49 = arith.constant 0 : index
    %c0_50 = arith.constant 0 : index
    %c0_51 = arith.constant 0 : index
    %134 = vector.load %arg8[%c0_49, %c0_50, %c0_51] : memref<2x32x64xf32, #tpu.memory_space<vmem>>, vector<1x32x64xf32>
    %135 = vector.shape_cast %134 : vector<1x32x64xf32> to vector<32x64xf32>
    %cst_52 = arith.constant dense<0.000000e+00> : vector<16x64xf32>
    %136 = tpu.matmul %133, %135, %cst_52 {dimension_numbers = #tpu.dot_dimension_numbers<[1], [0], [0], [1], [0, 0, 1, 1], [], []>} : vector<16x32xf32>, vector<32x64xf32>, vector<16x64xf32> -> vector<16x64xf32>
    %c0_53 = arith.constant 0 : index
    %c0_54 = arith.constant 0 : index
    %c0_55 = arith.constant 0 : index
    %137 = vector.load %arg9[%c0_53, %c0_54, %c0_55] : memref<2x1x64xf32, #tpu.memory_space<vmem>>, vector<1x1x64xf32>
    %138 = vector.shape_cast %137 : vector<1x1x64xf32> to vector<1x64xf32>
    %139 = vector.broadcast %138 : vector<1x64xf32> to vector<16x64xf32>
    %140 = arith.addf %136, %139 : vector<16x64xf32>
    %cst_56 = arith.constant 0.000000e+00 : f32
    %141 = vector.broadcast %cst_56 : f32 to vector<16x64xf32>
    %142 = arith.maximumf %140, %141 : vector<16x64xf32>
    %c0_57 = arith.constant 0 : index
    %c0_58 = arith.constant 0 : index
    %c0_59 = arith.constant 0 : index
    %143 = vector.load %arg10[%c0_57, %c0_58, %c0_59] : memref<2x64x32xf32, #tpu.memory_space<vmem>>, vector<1x64x32xf32>
    %144 = vector.shape_cast %143 : vector<1x64x32xf32> to vector<64x32xf32>
    %cst_60 = arith.constant dense<0.000000e+00> : vector<16x32xf32>
    %145 = tpu.matmul %142, %144, %cst_60 {dimension_numbers = #tpu.dot_dimension_numbers<[1], [0], [0], [1], [0, 0, 1, 1], [], []>} : vector<16x64xf32>, vector<64x32xf32>, vector<16x32xf32> -> vector<16x32xf32>
    %c0_61 = arith.constant 0 : index
    %c0_62 = arith.constant 0 : index
    %c0_63 = arith.constant 0 : index
    %146 = vector.load %arg11[%c0_61, %c0_62, %c0_63] : memref<2x1x32xf32, #tpu.memory_space<vmem>>, vector<1x1x32xf32>
    %147 = vector.shape_cast %146 : vector<1x1x32xf32> to vector<1x32xf32>
    %148 = vector.broadcast %147 : vector<1x32xf32> to vector<16x32xf32>
    %149 = arith.addf %145, %148 : vector<16x32xf32>
    %150 = arith.addf %149, %111 : vector<16x32xf32>
    %c1 = arith.constant 1 : index
    %c0_64 = arith.constant 0 : index
    %c0_65 = arith.constant 0 : index
    %151 = vector.load %arg5[%c1, %c0_64, %c0_65] : memref<2x4x32xf32, #tpu.memory_space<vmem>>, vector<1x4x32xf32>
    %152 = vector.shape_cast %151 : vector<1x4x32xf32> to vector<4x32xf32>
    %c1_66 = arith.constant 1 : index
    %c0_67 = arith.constant 0 : index
    %c0_68 = arith.constant 0 : index
    %153 = vector.load %arg6[%c1_66, %c0_67, %c0_68] : memref<2x32x128xf32, #tpu.memory_space<vmem>>, vector<1x32x128xf32>
    %154 = vector.shape_cast %153 : vector<1x32x128xf32> to vector<32x128xf32>
    %c1_69 = arith.constant 1 : index
    %c0_70 = arith.constant 0 : index
    %c0_71 = arith.constant 0 : index
    %155 = vector.load %arg7[%c1_69, %c0_70, %c0_71] : memref<2x1x128xf32, #tpu.memory_space<vmem>>, vector<1x1x128xf32>
    %156 = vector.shape_cast %155 : vector<1x1x128xf32> to vector<1x128xf32>
    %157 = vector.extract_strided_slice %152 {offsets = [0, 0], sizes = [1, 32], strides = [1, 1]} : vector<4x32xf32> to vector<1x32xf32>
    %158 = vector.extract_strided_slice %152 {offsets = [1, 0], sizes = [1, 32], strides = [1, 1]} : vector<4x32xf32> to vector<1x32xf32>
    %cst_72 = arith.constant dense<0.000000e+00> : vector<16xf32>
    %159 = vector.multi_reduction <add>, %150, %cst_72 [1] : vector<16x32xf32> to vector<16xf32>
    %160 = vector.shape_cast %159 : vector<16xf32> to vector<16x1xf32>
    %cst_73 = arith.constant 3.200000e+01 : f32
    %161 = vector.broadcast %cst_73 : f32 to vector<16x1xf32>
    %162 = arith.divf %160, %161 : vector<16x1xf32>
    %163 = vector.broadcast %162 : vector<16x1xf32> to vector<16x32xf32>
    %164 = arith.subf %150, %163 : vector<16x32xf32>
    %165 = arith.mulf %164, %164 : vector<16x32xf32>
    %cst_74 = arith.constant dense<0.000000e+00> : vector<16xf32>
    %166 = vector.multi_reduction <add>, %165, %cst_74 [1] : vector<16x32xf32> to vector<16xf32>
    %167 = vector.shape_cast %166 : vector<16xf32> to vector<16x1xf32>
    %cst_75 = arith.constant 3.200000e+01 : f32
    %168 = vector.broadcast %cst_75 : f32 to vector<16x1xf32>
    %169 = arith.divf %167, %168 : vector<16x1xf32>
    %cst_76 = arith.constant 9.99999997E-7 : f32
    %170 = vector.broadcast %cst_76 : f32 to vector<16x1xf32>
    %171 = arith.addf %169, %170 : vector<16x1xf32>
    %172 = math.rsqrt %171 : vector<16x1xf32>
    %173 = vector.broadcast %172 : vector<16x1xf32> to vector<16x32xf32>
    %174 = arith.mulf %164, %173 : vector<16x32xf32>
    %175 = vector.broadcast %157 : vector<1x32xf32> to vector<16x32xf32>
    %176 = arith.mulf %174, %175 : vector<16x32xf32>
    %177 = vector.broadcast %158 : vector<1x32xf32> to vector<16x32xf32>
    %178 = arith.addf %176, %177 : vector<16x32xf32>
    %cst_77 = arith.constant dense<0.000000e+00> : vector<16x128xf32>
    %179 = tpu.matmul %178, %154, %cst_77 {dimension_numbers = #tpu.dot_dimension_numbers<[1], [0], [0], [1], [0, 0, 1, 1], [], []>} : vector<16x32xf32>, vector<32x128xf32>, vector<16x128xf32> -> vector<16x128xf32>
    %180 = vector.broadcast %156 : vector<1x128xf32> to vector<16x128xf32>
    %181 = arith.addf %179, %180 : vector<16x128xf32>
    %182 = vector.extract_strided_slice %156 {offsets = [0, 96], sizes = [1, 32], strides = [1, 1]} : vector<1x128xf32> to vector<1x32xf32>
    %183 = vector.broadcast %182 : vector<1x32xf32> to vector<16x32xf32>
    %184 = arith.addf %150, %183 : vector<16x32xf32>
    %185 = vector.extract_strided_slice %181 {offsets = [0, 0], sizes = [16, 8], strides = [1, 1]} : vector<16x128xf32> to vector<16x8xf32>
    %186 = vector.extract_strided_slice %181 {offsets = [0, 32], sizes = [16, 8], strides = [1, 1]} : vector<16x128xf32> to vector<16x8xf32>
    %187 = vector.extract_strided_slice %181 {offsets = [0, 64], sizes = [16, 8], strides = [1, 1]} : vector<16x128xf32> to vector<16x8xf32>
    %cst_78 = arith.constant dense<0.000000e+00> : vector<16x16xf32>
    %188 = tpu.matmul %185, %186, %cst_78 {dimension_numbers = #tpu.dot_dimension_numbers<[1], [1], [0], [0], [0, 0, 1, 0], [], []>} : vector<16x8xf32>, vector<16x8xf32>, vector<16x16xf32> -> vector<16x16xf32>
    %cst_79 = arith.constant dense<0xFF800000> : vector<16xf32>
    %189 = vector.multi_reduction <maximumf>, %188, %cst_79 [1] : vector<16x16xf32> to vector<16xf32>
    %190 = vector.shape_cast %189 : vector<16xf32> to vector<16x1xf32>
    %191 = vector.broadcast %190 : vector<16x1xf32> to vector<16x16xf32>
    %192 = arith.subf %188, %191 : vector<16x16xf32>
    %193 = math.exp %192 : vector<16x16xf32>
    %cst_80 = arith.constant dense<0.000000e+00> : vector<16xf32>
    %194 = vector.multi_reduction <add>, %193, %cst_80 [1] : vector<16x16xf32> to vector<16xf32>
    %195 = vector.shape_cast %194 : vector<16xf32> to vector<16x1xf32>
    %196 = vector.broadcast %195 : vector<16x1xf32> to vector<16x16xf32>
    %197 = arith.divf %193, %196 : vector<16x16xf32>
    %cst_81 = arith.constant dense<0.000000e+00> : vector<16x8xf32>
    %198 = tpu.matmul %197, %187, %cst_81 {dimension_numbers = #tpu.dot_dimension_numbers<[1], [0], [0], [1], [0, 0, 1, 1], [], []>} : vector<16x16xf32>, vector<16x8xf32>, vector<16x8xf32> -> vector<16x8xf32>
    %199 = vector.extract_strided_slice %154 {offsets = [0, 96], sizes = [8, 32], strides = [1, 1]} : vector<32x128xf32> to vector<8x32xf32>
    %cst_82 = arith.constant dense<0.000000e+00> : vector<16x32xf32>
    %200 = tpu.matmul %198, %199, %cst_82 {dimension_numbers = #tpu.dot_dimension_numbers<[1], [0], [0], [1], [0, 0, 1, 1], [], []>} : vector<16x8xf32>, vector<8x32xf32>, vector<16x32xf32> -> vector<16x32xf32>
    %201 = arith.addf %184, %200 : vector<16x32xf32>
    %202 = vector.extract_strided_slice %181 {offsets = [0, 8], sizes = [16, 8], strides = [1, 1]} : vector<16x128xf32> to vector<16x8xf32>
    %203 = vector.extract_strided_slice %181 {offsets = [0, 40], sizes = [16, 8], strides = [1, 1]} : vector<16x128xf32> to vector<16x8xf32>
    %204 = vector.extract_strided_slice %181 {offsets = [0, 72], sizes = [16, 8], strides = [1, 1]} : vector<16x128xf32> to vector<16x8xf32>
    %cst_83 = arith.constant dense<0.000000e+00> : vector<16x16xf32>
    %205 = tpu.matmul %202, %203, %cst_83 {dimension_numbers = #tpu.dot_dimension_numbers<[1], [1], [0], [0], [0, 0, 1, 0], [], []>} : vector<16x8xf32>, vector<16x8xf32>, vector<16x16xf32> -> vector<16x16xf32>
    %cst_84 = arith.constant dense<0xFF800000> : vector<16xf32>
    %206 = vector.multi_reduction <maximumf>, %205, %cst_84 [1] : vector<16x16xf32> to vector<16xf32>
    %207 = vector.shape_cast %206 : vector<16xf32> to vector<16x1xf32>
    %208 = vector.broadcast %207 : vector<16x1xf32> to vector<16x16xf32>
    %209 = arith.subf %205, %208 : vector<16x16xf32>
    %210 = math.exp %209 : vector<16x16xf32>
    %cst_85 = arith.constant dense<0.000000e+00> : vector<16xf32>
    %211 = vector.multi_reduction <add>, %210, %cst_85 [1] : vector<16x16xf32> to vector<16xf32>
    %212 = vector.shape_cast %211 : vector<16xf32> to vector<16x1xf32>
    %213 = vector.broadcast %212 : vector<16x1xf32> to vector<16x16xf32>
    %214 = arith.divf %210, %213 : vector<16x16xf32>
    %cst_86 = arith.constant dense<0.000000e+00> : vector<16x8xf32>
    %215 = tpu.matmul %214, %204, %cst_86 {dimension_numbers = #tpu.dot_dimension_numbers<[1], [0], [0], [1], [0, 0, 1, 1], [], []>} : vector<16x16xf32>, vector<16x8xf32>, vector<16x8xf32> -> vector<16x8xf32>
    %216 = vector.extract_strided_slice %154 {offsets = [8, 96], sizes = [8, 32], strides = [1, 1]} : vector<32x128xf32> to vector<8x32xf32>
    %cst_87 = arith.constant dense<0.000000e+00> : vector<16x32xf32>
    %217 = tpu.matmul %215, %216, %cst_87 {dimension_numbers = #tpu.dot_dimension_numbers<[1], [0], [0], [1], [0, 0, 1, 1], [], []>} : vector<16x8xf32>, vector<8x32xf32>, vector<16x32xf32> -> vector<16x32xf32>
    %218 = arith.addf %201, %217 : vector<16x32xf32>
    %219 = vector.extract_strided_slice %181 {offsets = [0, 16], sizes = [16, 8], strides = [1, 1]} : vector<16x128xf32> to vector<16x8xf32>
    %220 = vector.extract_strided_slice %181 {offsets = [0, 48], sizes = [16, 8], strides = [1, 1]} : vector<16x128xf32> to vector<16x8xf32>
    %221 = vector.extract_strided_slice %181 {offsets = [0, 80], sizes = [16, 8], strides = [1, 1]} : vector<16x128xf32> to vector<16x8xf32>
    %cst_88 = arith.constant dense<0.000000e+00> : vector<16x16xf32>
    %222 = tpu.matmul %219, %220, %cst_88 {dimension_numbers = #tpu.dot_dimension_numbers<[1], [1], [0], [0], [0, 0, 1, 0], [], []>} : vector<16x8xf32>, vector<16x8xf32>, vector<16x16xf32> -> vector<16x16xf32>
    %cst_89 = arith.constant dense<0xFF800000> : vector<16xf32>
    %223 = vector.multi_reduction <maximumf>, %222, %cst_89 [1] : vector<16x16xf32> to vector<16xf32>
    %224 = vector.shape_cast %223 : vector<16xf32> to vector<16x1xf32>
    %225 = vector.broadcast %224 : vector<16x1xf32> to vector<16x16xf32>
    %226 = arith.subf %222, %225 : vector<16x16xf32>
    %227 = math.exp %226 : vector<16x16xf32>
    %cst_90 = arith.constant dense<0.000000e+00> : vector<16xf32>
    %228 = vector.multi_reduction <add>, %227, %cst_90 [1] : vector<16x16xf32> to vector<16xf32>
    %229 = vector.shape_cast %228 : vector<16xf32> to vector<16x1xf32>
    %230 = vector.broadcast %229 : vector<16x1xf32> to vector<16x16xf32>
    %231 = arith.divf %227, %230 : vector<16x16xf32>
    %cst_91 = arith.constant dense<0.000000e+00> : vector<16x8xf32>
    %232 = tpu.matmul %231, %221, %cst_91 {dimension_numbers = #tpu.dot_dimension_numbers<[1], [0], [0], [1], [0, 0, 1, 1], [], []>} : vector<16x16xf32>, vector<16x8xf32>, vector<16x8xf32> -> vector<16x8xf32>
    %233 = vector.extract_strided_slice %154 {offsets = [16, 96], sizes = [8, 32], strides = [1, 1]} : vector<32x128xf32> to vector<8x32xf32>
    %cst_92 = arith.constant dense<0.000000e+00> : vector<16x32xf32>
    %234 = tpu.matmul %232, %233, %cst_92 {dimension_numbers = #tpu.dot_dimension_numbers<[1], [0], [0], [1], [0, 0, 1, 1], [], []>} : vector<16x8xf32>, vector<8x32xf32>, vector<16x32xf32> -> vector<16x32xf32>
    %235 = arith.addf %218, %234 : vector<16x32xf32>
    %236 = vector.extract_strided_slice %181 {offsets = [0, 24], sizes = [16, 8], strides = [1, 1]} : vector<16x128xf32> to vector<16x8xf32>
    %237 = vector.extract_strided_slice %181 {offsets = [0, 56], sizes = [16, 8], strides = [1, 1]} : vector<16x128xf32> to vector<16x8xf32>
    %238 = vector.extract_strided_slice %181 {offsets = [0, 88], sizes = [16, 8], strides = [1, 1]} : vector<16x128xf32> to vector<16x8xf32>
    %cst_93 = arith.constant dense<0.000000e+00> : vector<16x16xf32>
    %239 = tpu.matmul %236, %237, %cst_93 {dimension_numbers = #tpu.dot_dimension_numbers<[1], [1], [0], [0], [0, 0, 1, 0], [], []>} : vector<16x8xf32>, vector<16x8xf32>, vector<16x16xf32> -> vector<16x16xf32>
    %cst_94 = arith.constant dense<0xFF800000> : vector<16xf32>
    %240 = vector.multi_reduction <maximumf>, %239, %cst_94 [1] : vector<16x16xf32> to vector<16xf32>
    %241 = vector.shape_cast %240 : vector<16xf32> to vector<16x1xf32>
    %242 = vector.broadcast %241 : vector<16x1xf32> to vector<16x16xf32>
    %243 = arith.subf %239, %242 : vector<16x16xf32>
    %244 = math.exp %243 : vector<16x16xf32>
    %cst_95 = arith.constant dense<0.000000e+00> : vector<16xf32>
    %245 = vector.multi_reduction <add>, %244, %cst_95 [1] : vector<16x16xf32> to vector<16xf32>
    %246 = vector.shape_cast %245 : vector<16xf32> to vector<16x1xf32>
    %247 = vector.broadcast %246 : vector<16x1xf32> to vector<16x16xf32>
    %248 = arith.divf %244, %247 : vector<16x16xf32>
    %cst_96 = arith.constant dense<0.000000e+00> : vector<16x8xf32>
    %249 = tpu.matmul %248, %238, %cst_96 {dimension_numbers = #tpu.dot_dimension_numbers<[1], [0], [0], [1], [0, 0, 1, 1], [], []>} : vector<16x16xf32>, vector<16x8xf32>, vector<16x8xf32> -> vector<16x8xf32>
    %250 = vector.extract_strided_slice %154 {offsets = [24, 96], sizes = [8, 32], strides = [1, 1]} : vector<32x128xf32> to vector<8x32xf32>
    %cst_97 = arith.constant dense<0.000000e+00> : vector<16x32xf32>
    %251 = tpu.matmul %249, %250, %cst_97 {dimension_numbers = #tpu.dot_dimension_numbers<[1], [0], [0], [1], [0, 0, 1, 1], [], []>} : vector<16x8xf32>, vector<8x32xf32>, vector<16x32xf32> -> vector<16x32xf32>
    %252 = arith.addf %235, %251 : vector<16x32xf32>
    %253 = vector.extract_strided_slice %152 {offsets = [2, 0], sizes = [1, 32], strides = [1, 1]} : vector<4x32xf32> to vector<1x32xf32>
    %254 = vector.extract_strided_slice %152 {offsets = [3, 0], sizes = [1, 32], strides = [1, 1]} : vector<4x32xf32> to vector<1x32xf32>
    %cst_98 = arith.constant dense<0.000000e+00> : vector<16xf32>
    %255 = vector.multi_reduction <add>, %252, %cst_98 [1] : vector<16x32xf32> to vector<16xf32>
    %256 = vector.shape_cast %255 : vector<16xf32> to vector<16x1xf32>
    %cst_99 = arith.constant 3.200000e+01 : f32
    %257 = vector.broadcast %cst_99 : f32 to vector<16x1xf32>
    %258 = arith.divf %256, %257 : vector<16x1xf32>
    %259 = vector.broadcast %258 : vector<16x1xf32> to vector<16x32xf32>
    %260 = arith.subf %252, %259 : vector<16x32xf32>
    %261 = arith.mulf %260, %260 : vector<16x32xf32>
    %cst_100 = arith.constant dense<0.000000e+00> : vector<16xf32>
    %262 = vector.multi_reduction <add>, %261, %cst_100 [1] : vector<16x32xf32> to vector<16xf32>
    %263 = vector.shape_cast %262 : vector<16xf32> to vector<16x1xf32>
    %cst_101 = arith.constant 3.200000e+01 : f32
    %264 = vector.broadcast %cst_101 : f32 to vector<16x1xf32>
    %265 = arith.divf %263, %264 : vector<16x1xf32>
    %cst_102 = arith.constant 9.99999997E-7 : f32
    %266 = vector.broadcast %cst_102 : f32 to vector<16x1xf32>
    %267 = arith.addf %265, %266 : vector<16x1xf32>
    %268 = math.rsqrt %267 : vector<16x1xf32>
    %269 = vector.broadcast %268 : vector<16x1xf32> to vector<16x32xf32>
    %270 = arith.mulf %260, %269 : vector<16x32xf32>
    %271 = vector.broadcast %253 : vector<1x32xf32> to vector<16x32xf32>
    %272 = arith.mulf %270, %271 : vector<16x32xf32>
    %273 = vector.broadcast %254 : vector<1x32xf32> to vector<16x32xf32>
    %274 = arith.addf %272, %273 : vector<16x32xf32>
    %c1_103 = arith.constant 1 : index
    %c0_104 = arith.constant 0 : index
    %c0_105 = arith.constant 0 : index
    %275 = vector.load %arg8[%c1_103, %c0_104, %c0_105] : memref<2x32x64xf32, #tpu.memory_space<vmem>>, vector<1x32x64xf32>
    %276 = vector.shape_cast %275 : vector<1x32x64xf32> to vector<32x64xf32>
    %cst_106 = arith.constant dense<0.000000e+00> : vector<16x64xf32>
    %277 = tpu.matmul %274, %276, %cst_106 {dimension_numbers = #tpu.dot_dimension_numbers<[1], [0], [0], [1], [0, 0, 1, 1], [], []>} : vector<16x32xf32>, vector<32x64xf32>, vector<16x64xf32> -> vector<16x64xf32>
    %c1_107 = arith.constant 1 : index
    %c0_108 = arith.constant 0 : index
    %c0_109 = arith.constant 0 : index
    %278 = vector.load %arg9[%c1_107, %c0_108, %c0_109] : memref<2x1x64xf32, #tpu.memory_space<vmem>>, vector<1x1x64xf32>
    %279 = vector.shape_cast %278 : vector<1x1x64xf32> to vector<1x64xf32>
    %280 = vector.broadcast %279 : vector<1x64xf32> to vector<16x64xf32>
    %281 = arith.addf %277, %280 : vector<16x64xf32>
    %cst_110 = arith.constant 0.000000e+00 : f32
    %282 = vector.broadcast %cst_110 : f32 to vector<16x64xf32>
    %283 = arith.maximumf %281, %282 : vector<16x64xf32>
    %c1_111 = arith.constant 1 : index
    %c0_112 = arith.constant 0 : index
    %c0_113 = arith.constant 0 : index
    %284 = vector.load %arg10[%c1_111, %c0_112, %c0_113] : memref<2x64x32xf32, #tpu.memory_space<vmem>>, vector<1x64x32xf32>
    %285 = vector.shape_cast %284 : vector<1x64x32xf32> to vector<64x32xf32>
    %cst_114 = arith.constant dense<0.000000e+00> : vector<16x32xf32>
    %286 = tpu.matmul %283, %285, %cst_114 {dimension_numbers = #tpu.dot_dimension_numbers<[1], [0], [0], [1], [0, 0, 1, 1], [], []>} : vector<16x64xf32>, vector<64x32xf32>, vector<16x32xf32> -> vector<16x32xf32>
    %c1_115 = arith.constant 1 : index
    %c0_116 = arith.constant 0 : index
    %c0_117 = arith.constant 0 : index
    %287 = vector.load %arg11[%c1_115, %c0_116, %c0_117] : memref<2x1x32xf32, #tpu.memory_space<vmem>>, vector<1x1x32xf32>
    %288 = vector.shape_cast %287 : vector<1x1x32xf32> to vector<1x32xf32>
    %289 = vector.broadcast %288 : vector<1x32xf32> to vector<16x32xf32>
    %290 = arith.addf %286, %289 : vector<16x32xf32>
    %291 = arith.addf %290, %252 : vector<16x32xf32>
    %c0_118 = arith.constant 0 : index
    %c0_119 = arith.constant 0 : index
    %292 = vector.load %arg12[%c0_118, %c0_119] : memref<2x32xf32, #tpu.memory_space<vmem>>, vector<1x32xf32>
    %c1_120 = arith.constant 1 : index
    %c0_121 = arith.constant 0 : index
    %293 = vector.load %arg12[%c1_120, %c0_121] : memref<2x32xf32, #tpu.memory_space<vmem>>, vector<1x32xf32>
    %cst_122 = arith.constant dense<0.000000e+00> : vector<16xf32>
    %294 = vector.multi_reduction <add>, %291, %cst_122 [1] : vector<16x32xf32> to vector<16xf32>
    %295 = vector.shape_cast %294 : vector<16xf32> to vector<16x1xf32>
    %cst_123 = arith.constant 3.200000e+01 : f32
    %296 = vector.broadcast %cst_123 : f32 to vector<16x1xf32>
    %297 = arith.divf %295, %296 : vector<16x1xf32>
    %298 = vector.broadcast %297 : vector<16x1xf32> to vector<16x32xf32>
    %299 = arith.subf %291, %298 : vector<16x32xf32>
    %300 = arith.mulf %299, %299 : vector<16x32xf32>
    %cst_124 = arith.constant dense<0.000000e+00> : vector<16xf32>
    %301 = vector.multi_reduction <add>, %300, %cst_124 [1] : vector<16x32xf32> to vector<16xf32>
    %302 = vector.shape_cast %301 : vector<16xf32> to vector<16x1xf32>
    %cst_125 = arith.constant 3.200000e+01 : f32
    %303 = vector.broadcast %cst_125 : f32 to vector<16x1xf32>
    %304 = arith.divf %302, %303 : vector<16x1xf32>
    %cst_126 = arith.constant 9.99999997E-7 : f32
    %305 = vector.broadcast %cst_126 : f32 to vector<16x1xf32>
    %306 = arith.addf %304, %305 : vector<16x1xf32>
    %307 = math.rsqrt %306 : vector<16x1xf32>
    %308 = vector.broadcast %307 : vector<16x1xf32> to vector<16x32xf32>
    %309 = arith.mulf %299, %308 : vector<16x32xf32>
    %310 = vector.broadcast %292 : vector<1x32xf32> to vector<16x32xf32>
    %311 = arith.mulf %309, %310 : vector<16x32xf32>
    %312 = vector.broadcast %293 : vector<1x32xf32> to vector<16x32xf32>
    %313 = arith.addf %311, %312 : vector<16x32xf32>
    %c0_127 = arith.constant 0 : index
    %c0_128 = arith.constant 0 : index
    %c0_129 = arith.constant 0 : index
    %314 = vector.load %arg13[%c0_127, %c0_128, %c0_129] : memref<1x16x32xf32, #tpu.memory_space<vmem>>, vector<1x16x32xf32>
    %315 = vector.shape_cast %314 : vector<1x16x32xf32> to vector<16x32xf32>
    %316 = vector.shape_cast %313 : vector<16x32xf32> to vector<1x16x32xf32>
    tpu.vector_store %arg13[%c0_127, %c0_128, %c0_129], %316 {strides = array<i32>} : memref<1x16x32xf32, #tpu.memory_space<vmem>>, vector<1x16x32xf32>,
    return
  }
  func.func @transform_0(%arg0: i32) -> (i32, i32, i32) {
    %c0_i32 = arith.constant 0 : i32
    %c0_i32_0 = arith.constant 0 : i32
    %c0_i32_1 = arith.constant 0 : i32
    return %arg0, %c0_i32, %c0_i32_0 : i32, i32, i32
  }
  func.func @transform_1(%arg0: i32) -> (i32, i32) {
    %c0_i32 = arith.constant 0 : i32
    %c0_i32_0 = arith.constant 0 : i32
    %c0_i32_1 = arith.constant 0 : i32
    return %c0_i32, %c0_i32_0 : i32, i32
  }
  func.func @transform_2(%arg0: i32) -> (i32, i32) {
    %c0_i32 = arith.constant 0 : i32
    %c0_i32_0 = arith.constant 0 : i32
    %c0_i32_1 = arith.constant 0 : i32
    return %c0_i32, %c0_i32_0 : i32, i32
  }
  func.func @transform_3(%arg0: i32) -> (i32, i32, i32) {
    %c0_i32 = arith.constant 0 : i32
    %c0_i32_0 = arith.constant 0 : i32
    %c0_i32_1 = arith.constant 0 : i32
    %c0_i32_2 = arith.constant 0 : i32
    return %c0_i32, %c0_i32_0, %c0_i32_1 : i32, i32, i32
  }
  func.func @transform_4(%arg0: i32) -> (i32, i32, i32) {
    %c0_i32 = arith.constant 0 : i32
    %c0_i32_0 = arith.constant 0 : i32
    %c0_i32_1 = arith.constant 0 : i32
    %c0_i32_2 = arith.constant 0 : i32
    return %c0_i32, %c0_i32_0, %c0_i32_1 : i32, i32, i32
  }
  func.func @transform_5(%arg0: i32) -> (i32, i32, i32) {
    %c0_i32 = arith.constant 0 : i32
    %c0_i32_0 = arith.constant 0 : i32
    %c0_i32_1 = arith.constant 0 : i32
    %c0_i32_2 = arith.constant 0 : i32
    return %c0_i32, %c0_i32_0, %c0_i32_1 : i32, i32, i32
  }
  func.func @transform_6(%arg0: i32) -> (i32, i32, i32) {
    %c0_i32 = arith.constant 0 : i32
    %c0_i32_0 = arith.constant 0 : i32
    %c0_i32_1 = arith.constant 0 : i32
    %c0_i32_2 = arith.constant 0 : i32
    return %c0_i32, %c0_i32_0, %c0_i32_1 : i32, i32, i32
  }
  func.func @transform_7(%arg0: i32) -> (i32, i32, i32) {
    %c0_i32 = arith.constant 0 : i32
    %c0_i32_0 = arith.constant 0 : i32
    %c0_i32_1 = arith.constant 0 : i32
    %c0_i32_2 = arith.constant 0 : i32
    return %c0_i32, %c0_i32_0, %c0_i32_1 : i32, i32, i32
  }
  func.func @transform_8(%arg0: i32) -> (i32, i32, i32) {
    %c0_i32 = arith.constant 0 : i32
    %c0_i32_0 = arith.constant 0 : i32
    %c0_i32_1 = arith.constant 0 : i32
    %c0_i32_2 = arith.constant 0 : i32
    return %c0_i32, %c0_i32_0, %c0_i32_1 : i32, i32, i32
  }
  func.func @transform_9(%arg0: i32) -> (i32, i32, i32) {
    %c0_i32 = arith.constant 0 : i32
    %c0_i32_0 = arith.constant 0 : i32
    %c0_i32_1 = arith.constant 0 : i32
    %c0_i32_2 = arith.constant 0 : i32
    return %c0_i32, %c0_i32_0, %c0_i32_1 : i32, i32, i32
  }
  func.func @transform_10(%arg0: i32) -> (i32, i32, i32) {
    %c0_i32 = arith.constant 0 : i32
    %c0_i32_0 = arith.constant 0 : i32
    %c0_i32_1 = arith.constant 0 : i32
    %c0_i32_2 = arith.constant 0 : i32
    return %c0_i32, %c0_i32_0, %c0_i32_1 : i32, i32, i32
  }
  func.func @transform_11(%arg0: i32) -> (i32, i32) {
    %c0_i32 = arith.constant 0 : i32
    %c0_i32_0 = arith.constant 0 : i32
    %c0_i32_1 = arith.constant 0 : i32
    return %c0_i32, %c0_i32_0 : i32, i32
  }
  func.func @transform_12(%arg0: i32) -> (i32, i32, i32) {
    %c0_i32 = arith.constant 0 : i32
    %c0_i32_0 = arith.constant 0 : i32
    %c0_i32_1 = arith.constant 0 : i32
    return %arg0, %c0_i32, %c0_i32_0 : i32, i32, i32
  }
}

</mosaic_0001>

<llo_original>
// kernel: tpu_custom_call.1
$region0: #{tpu_custom_call.1}
  #allocation0 [shape = 'u32[]', space=smem, size = 0x4, offset = 0x4, fixed_abs, tag = 'smem constant byte address 0x4 - core index']
  #allocation1 [shape = 'u32[72,128]{1,0:T(1,128)}', space=vmem, size = 0x9000, scoped, tag = 'internal scratch']
  %s0 = inlined_call_operand.vmem [shape: f32[2,16,64], index: 0, kind: input, shape index: {}]
  %s1 = inlined_call_operand.vmem [shape: f32[64,32], index: 1, kind: input, shape index: {}]
  %s2 = inlined_call_operand.vmem [shape: f32[1,32], index: 2, kind: input, shape index: {}]
  %s3 = inlined_call_operand.vmem [shape: f32[1,16,32], index: 3, kind: input, shape index: {}]
  %s4 = inlined_call_operand.vmem [shape: f32[2,4,32], index: 4, kind: input, shape index: {}]
  %s5 = inlined_call_operand.vmem [shape: f32[2,32,128], index: 5, kind: input, shape index: {}]
  %s6 = inlined_call_operand.vmem [shape: f32[2,1,128], index: 6, kind: input, shape index: {}]
  %s7 = inlined_call_operand.vmem [shape: f32[2,32,64], index: 7, kind: input, shape index: {}]
  %s8 = inlined_call_operand.vmem [shape: f32[2,1,64], index: 8, kind: input, shape index: {}]
  %s9 = inlined_call_operand.vmem [shape: f32[2,64,32], index: 9, kind: input, shape index: {}]
  %s10 = inlined_call_operand.vmem [shape: f32[2,1,32], index: 10, kind: input, shape index: {}]
  %s11 = inlined_call_operand.vmem [shape: f32[2,32], index: 11, kind: input, shape index: {}]
  %s12 = inlined_call_operand.hbm [shape: f32[2,16,32], index: 12, kind: output, shape index: {}]
  %s13 = sld [smem:[#allocation0]]
  $region81: #{tpu_custom_call.1} parent=0
    _
  %s15 = ssub.s32 1, %s13
  %s16 = scalar_select 0, %s15, %s13
  $region1: #{tpu_custom_call.1} parent=0
    #allocation2 [shape = 'u8[16384]{0}', space=vmem, size = 0x4000, scoped, tag = 'output window, operand 0']
    #allocation3 [shape = 's32[2]{0}', space=sflag, size = 0x8, scoped, tag = 'scoped memory for tpu_custom_call.1']
    %17 = vsyncpa [#allocation3], 0
    %s18 = scalar_lea.sflag [#allocation3], 1
    %19 = vsyncpa %s18, 0
    loop: start=0, step=1, limit=4
    $region2: #{tpu_custom_call.1} parent=1 // loop_pre_header
      _
    $region3: #{tpu_custom_call.1} parent=1 // loop_header
      %s21 = sphi 0, %s25
      %p22 = scmp.ge.s32.totalorder %s21, 4
      %s31 = sphi 0, %s33
      %s34 = sphi 0, %s31
      %s35 = sphi 0, %s34
      %s51 = sphi 0, %s35
      %s55 = sphi 0, %s55
      %s57 = sphi 0, %s55
      %s58 = sphi 0, %s57
      %s72 = sphi 0, %s58
      %s76 = sphi 0, %s76
      %s78 = sphi 0, %s76
      %s79 = sphi 0, %s78
      %s93 = sphi 0, %s79
      %s97 = sphi 0, %s97
      %s99 = sphi 0, %s97
      %s100 = sphi 0, %s99
      %s114 = sphi 0, %s100
      %s118 = sphi 0, %s118
      %s120 = sphi 0, %s118
      %s121 = sphi 0, %s120
      %s135 = sphi 0, %s121
      %s139 = sphi 0, %s139
      %s141 = sphi 0, %s139
      %s142 = sphi 0, %s141
      %s156 = sphi 0, %s142
      %s160 = sphi 0, %s160
      %s162 = sphi 0, %s160
      %s163 = sphi 0, %s162
      %s177 = sphi 0, %s163
      %s181 = sphi 0, %s181
      %s183 = sphi 0, %s181
      %s184 = sphi 0, %s183
      %s198 = sphi 0, %s184
      %s202 = sphi 0, %s202
      %s204 = sphi 0, %s202
      %s205 = sphi 0, %s204
      %s219 = sphi 0, %s205
      %s223 = sphi 0, %s223
      %s225 = sphi 0, %s223
      %s226 = sphi 0, %s225
      %s240 = sphi 0, %s226
      %s244 = sphi 0, %s244
      %s246 = sphi 0, %s244
      %s247 = sphi 0, %s246
      %s261 = sphi 0, %s247
      %s265 = sphi 0, %s265
      %s267 = sphi 0, %s265
      %s268 = sphi 0, %s267
      %s282 = sphi 0, %s268
      %s288 = sphi 0, %s290
      %s291 = sphi 0, %s288
      %s292 = sphi 0, %s291
      %s308 = sphi 0, %s292
    $region4: #{tpu_custom_call.1} parent=1 // loop_header_branch
      %24 = sbr.rel (%p22) target = $region8
    $region5: #{tpu_custom_call.1} parent=1 // loop_body
      %s26 = ssub.s32 %s21, 1
      %s27 = ssub.s32 %s21, 2
      %s28 = sadd.s32 %s21, 1
      %s29 = ssub.s32 %s21, %s28
      %p30 = scmp.eq.s32.totalorder %s29, 0
      %s32 = sadd.s32 %s31, 1
      %s33 = scalar_select %p30, %s31, %s32
      %p36 = pneg %p30
      %p37 = scmp.eq.s32.totalorder %s21, 1
      %p38 = por %p36, %p37
      %p39 = scmp.ne.s32.totalorder %s31, %s34
      %p40 = scmp.eq.s32.totalorder %s21, 0
      %p41 = por %p39, %p40
      %p42 = scmp.ne.s32.totalorder %s31, %s34
      %p43 = scmp.eq.s32.totalorder %s26, 1
      %p44 = por %p42, %p43
      %p45 = scmp.ne.s32.totalorder %s34, %s35
      %p46 = scmp.eq.s32.totalorder %s26, 0
      %p47 = por %p45, %p46
      %p48 = scmp.ne.s32.totalorder %s34, %s35
      %p49 = scmp.eq.s32.totalorder %s27, 1
      %p50 = por %p48, %p49
      %p52 = scmp.ne.s32.totalorder %s35, %s51
      %p53 = scmp.eq.s32.totalorder %s27, 0
      %p54 = por %p52, %p53
      %s56 = sadd.s32 %s55, 1
      %p59 = scmp.eq.s32.totalorder %s21, 1
      %p60 = scmp.ne.s32.totalorder %s55, %s57
      %p61 = scmp.eq.s32.totalorder %s21, 0
      %p62 = por %p60, %p61
      %p63 = scmp.ne.s32.totalorder %s55, %s57
      %p64 = scmp.eq.s32.totalorder %s26, 1
      %p65 = por %p63, %p64
      %p66 = scmp.ne.s32.totalorder %s57, %s58
      %p67 = scmp.eq.s32.totalorder %s26, 0
      %p68 = por %p66, %p67
      %p69 = scmp.ne.s32.totalorder %s57, %s58
      %p70 = scmp.eq.s32.totalorder %s27, 1
      %p71 = por %p69, %p70
      %p73 = scmp.ne.s32.totalorder %s58, %s72
      %p74 = scmp.eq.s32.totalorder %s27, 0
      %p75 = por %p73, %p74
      %s77 = sadd.s32 %s76, 1
      %p80 = scmp.eq.s32.totalorder %s21, 1
      %p81 = scmp.ne.s32.totalorder %s76, %s78
      %p82 = scmp.eq.s32.totalorder %s21, 0
      %p83 = por %p81, %p82
      %p84 = scmp.ne.s32.totalorder %s76, %s78
      %p85 = scmp.eq.s32.totalorder %s26, 1
      %p86 = por %p84, %p85
      %p87 = scmp.ne.s32.totalorder %s78, %s79
      %p88 = scmp.eq.s32.totalorder %s26, 0
      %p89 = por %p87, %p88
      %p90 = scmp.ne.s32.totalorder %s78, %s79
      %p91 = scmp.eq.s32.totalorder %s27, 1
      %p92 = por %p90, %p91
      %p94 = scmp.ne.s32.totalorder %s79, %s93
      %p95 = scmp.eq.s32.totalorder %s27, 0
      %p96 = por %p94, %p95
      %s98 = sadd.s32 %s97, 1
      %p101 = scmp.eq.s32.totalorder %s21, 1
      %p102 = scmp.ne.s32.totalorder %s97, %s99
      %p103 = scmp.eq.s32.totalorder %s21, 0
      %p104 = por %p102, %p103
      %p105 = scmp.ne.s32.totalorder %s97, %s99
      %p106 = scmp.eq.s32.totalorder %s26, 1
      %p107 = por %p105, %p106
      %p108 = scmp.ne.s32.totalorder %s99, %s100
      %p109 = scmp.eq.s32.totalorder %s26, 0
      %p110 = por %p108, %p109
      %p111 = scmp.ne.s32.totalorder %s99, %s100
      %p112 = scmp.eq.s32.totalorder %s27, 1
      %p113 = por %p111, %p112
      %p115 = scmp.ne.s32.totalorder %s100, %s114
      %p116 = scmp.eq.s32.totalorder %s27, 0
      %p117 = por %p115, %p116
      %s119 = sadd.s32 %s118, 1
      %p122 = scmp.eq.s32.totalorder %s21, 1
      %p123 = scmp.ne.s32.totalorder %s118, %s120
      %p124 = scmp.eq.s32.totalorder %s21, 0
      %p125 = por %p123, %p124
      %p126 = scmp.ne.s32.totalorder %s118, %s120
      %p127 = scmp.eq.s32.totalorder %s26, 1
      %p128 = por %p126, %p127
      %p129 = scmp.ne.s32.totalorder %s120, %s121
      %p130 = scmp.eq.s32.totalorder %s26, 0
      %p131 = por %p129, %p130
      %p132 = scmp.ne.s32.totalorder %s120, %s121
      %p133 = scmp.eq.s32.totalorder %s27, 1
      %p134 = por %p132, %p133
      %p136 = scmp.ne.s32.totalorder %s121, %s135
      %p137 = scmp.eq.s32.totalorder %s27, 0
      %p138 = por %p136, %p137
      %s140 = sadd.s32 %s139, 1
      %p143 = scmp.eq.s32.totalorder %s21, 1
      %p144 = scmp.ne.s32.totalorder %s139, %s141
      %p145 = scmp.eq.s32.totalorder %s21, 0
      %p146 = por %p144, %p145
      %p147 = scmp.ne.s32.totalorder %s139, %s141
      %p148 = scmp.eq.s32.totalorder %s26, 1
      %p149 = por %p147, %p148
      %p150 = scmp.ne.s32.totalorder %s141, %s142
      %p151 = scmp.eq.s32.totalorder %s26, 0
      %p152 = por %p150, %p151
      %p153 = scmp.ne.s32.totalorder %s141, %s142
      %p154 = scmp.eq.s32.totalorder %s27, 1
      %p155 = por %p153, %p154
      %p157 = scmp.ne.s32.totalorder %s142, %s156
      %p158 = scmp.eq.s32.totalorder %s27, 0
      %p159 = por %p157, %p158
      %s161 = sadd.s32 %s160, 1
      %p164 = scmp.eq.s32.totalorder %s21, 1
      %p165 = scmp.ne.s32.totalorder %s160, %s162
      %p166 = scmp.eq.s32.totalorder %s21, 0
      %p167 = por %p165, %p166
      %p168 = scmp.ne.s32.totalorder %s160, %s162
      %p169 = scmp.eq.s32.totalorder %s26, 1
      %p170 = por %p168, %p169
      %p171 = scmp.ne.s32.totalorder %s162, %s163
      %p172 = scmp.eq.s32.totalorder %s26, 0
      %p173 = por %p171, %p172
      %p174 = scmp.ne.s32.totalorder %s162, %s163
      %p175 = scmp.eq.s32.totalorder %s27, 1
      %p176 = por %p174, %p175
      %p178 = scmp.ne.s32.totalorder %s163, %s177
      %p179 = scmp.eq.s32.totalorder %s27, 0
      %p180 = por %p178, %p179
      %s182 = sadd.s32 %s181, 1
      %p185 = scmp.eq.s32.totalorder %s21, 1
      %p186 = scmp.ne.s32.totalorder %s181, %s183
      %p187 = scmp.eq.s32.totalorder %s21, 0
      %p188 = por %p186, %p187
      %p189 = scmp.ne.s32.totalorder %s181, %s183
      %p190 = scmp.eq.s32.totalorder %s26, 1
      %p191 = por %p189, %p190
      %p192 = scmp.ne.s32.totalorder %s183, %s184
      %p193 = scmp.eq.s32.totalorder %s26, 0
      %p194 = por %p192, %p193
      %p195 = scmp.ne.s32.totalorder %s183, %s184
      %p196 = scmp.eq.s32.totalorder %s27, 1
      %p197 = por %p195, %p196
      %p199 = scmp.ne.s32.totalorder %s184, %s198
      %p200 = scmp.eq.s32.totalorder %s27, 0
      %p201 = por %p199, %p200
      %s203 = sadd.s32 %s202, 1
      %p206 = scmp.eq.s32.totalorder %s21, 1
      %p207 = scmp.ne.s32.totalorder %s202, %s204
      %p208 = scmp.eq.s32.totalorder %s21, 0
      %p209 = por %p207, %p208
      %p210 = scmp.ne.s32.totalorder %s202, %s204
      %p211 = scmp.eq.s32.totalorder %s26, 1
      %p212 = por %p210, %p211
      %p213 = scmp.ne.s32.totalorder %s204, %s205
      %p214 = scmp.eq.s32.totalorder %s26, 0
      %p215 = por %p213, %p214
      %p216 = scmp.ne.s32.totalorder %s204, %s205
      %p217 = scmp.eq.s32.totalorder %s27, 1
      %p218 = por %p216, %p217
      %p220 = scmp.ne.s32.totalorder %s205, %s219
      %p221 = scmp.eq.s32.totalorder %s27, 0
      %p222 = por %p220, %p221
      %s224 = sadd.s32 %s223, 1
      %p227 = scmp.eq.s32.totalorder %s21, 1
      %p228 = scmp.ne.s32.totalorder %s223, %s225
      %p229 = scmp.eq.s32.totalorder %s21, 0
      %p230 = por %p228, %p229
      %p231 = scmp.ne.s32.totalorder %s223, %s225
      %p232 = scmp.eq.s32.totalorder %s26, 1
      %p233 = por %p231, %p232
      %p234 = scmp.ne.s32.totalorder %s225, %s226
      %p235 = scmp.eq.s32.totalorder %s26, 0
      %p236 = por %p234, %p235
      %p237 = scmp.ne.s32.totalorder %s225, %s226
      %p238 = scmp.eq.s32.totalorder %s27, 1
      %p239 = por %p237, %p238
      %p241 = scmp.ne.s32.totalorder %s226, %s240
      %p242 = scmp.eq.s32.totalorder %s27, 0
      %p243 = por %p241, %p242
      %s245 = sadd.s32 %s244, 1
      %p248 = scmp.eq.s32.totalorder %s21, 1
      %p249 = scmp.ne.s32.totalorder %s244, %s246
      %p250 = scmp.eq.s32.totalorder %s21, 0
      %p251 = por %p249, %p250
      %p252 = scmp.ne.s32.totalorder %s244, %s246
      %p253 = scmp.eq.s32.totalorder %s26, 1
      %p254 = por %p252, %p253
      %p255 = scmp.ne.s32.totalorder %s246, %s247
      %p256 = scmp.eq.s32.totalorder %s26, 0
      %p257 = por %p255, %p256
      %p258 = scmp.ne.s32.totalorder %s246, %s247
      %p259 = scmp.eq.s32.totalorder %s27, 1
      %p260 = por %p258, %p259
      %p262 = scmp.ne.s32.totalorder %s247, %s261
      %p263 = scmp.eq.s32.totalorder %s27, 0
      %p264 = por %p262, %p263
      %s266 = sadd.s32 %s265, 1
      %p269 = scmp.eq.s32.totalorder %s21, 1
      %p270 = scmp.ne.s32.totalorder %s265, %s267
      %p271 = scmp.eq.s32.totalorder %s21, 0
      %p272 = por %p270, %p271
      %p273 = scmp.ne.s32.totalorder %s265, %s267
      %p274 = scmp.eq.s32.totalorder %s26, 1
      %p275 = por %p273, %p274
      %p276 = scmp.ne.s32.totalorder %s267, %s268
      %p277 = scmp.eq.s32.totalorder %s26, 0
      %p278 = por %p276, %p277
      %p279 = scmp.ne.s32.totalorder %s267, %s268
      %p280 = scmp.eq.s32.totalorder %s27, 1
      %p281 = por %p279, %p280
      %p283 = scmp.ne.s32.totalorder %s268, %s282
      %p284 = scmp.eq.s32.totalorder %s27, 0
      %p285 = por %p283, %p284
      %s286 = ssub.s32 %s21, %s28
      %p287 = scmp.eq.s32.totalorder %s286, 0
      %s289 = sadd.s32 %s288, 1
      %s290 = scalar_select %p287, %s288, %s289
      %p293 = pneg %p287
      %p294 = scmp.eq.s32.totalorder %s21, 1
      %p295 = por %p293, %p294
      %p296 = scmp.ne.s32.totalorder %s288, %s291
      %p297 = scmp.eq.s32.totalorder %s21, 0
      %p298 = por %p296, %p297
      %p299 = scmp.ne.s32.totalorder %s288, %s291
      %p300 = scmp.eq.s32.totalorder %s26, 1
      %p301 = por %p299, %p300
      %p302 = scmp.ne.s32.totalorder %s291, %s292
      %p303 = scmp.eq.s32.totalorder %s26, 0
      %p304 = por %p302, %p303
      %p305 = scmp.ne.s32.totalorder %s291, %s292
      %p306 = scmp.eq.s32.totalorder %s27, 1
      %p307 = por %p305, %p306
      %p309 = scmp.ne.s32.totalorder %s292, %s308
      %p310 = scmp.eq.s32.totalorder %s27, 0
      %p311 = por %p309, %p310
      %p312 = scmp.le.s32.totalorder 1, %s21
      %p313 = scmp.lt.s32.totalorder %s21, 3
      %p314 = pnand %p312, %p313
      %p315 = pneg %p314
      // Predicated region
      $region9: #{tpu_custom_call.1} parent=5 // pred_check
        _
      $region10: #{tpu_custom_call.1} parent=5 // pred_check_branch
        %317 = sbr.rel (%p314) target = $region12
      $region11: #{tpu_custom_call.1} parent=5 // pred_region
        %s318 = ssub.s32 %s21, 1
        // Predicated region
        $region13: #{tpu_custom_call.1} parent=11 // pred_check
          %p319 = pneg %p68
        $region14: #{tpu_custom_call.1} parent=11 // pred_check_branch
          %321 = sbr.rel (%p319) target = $region16
        $region15: #{tpu_custom_call.1} parent=11 // pred_region
          _
        $region16: #{tpu_custom_call.1} parent=11 // pred_fallthru
          _
        // Predicated region
        $region17: #{tpu_custom_call.1} parent=11 // pred_check
          %p322 = pneg %p89
        $region18: #{tpu_custom_call.1} parent=11 // pred_check_branch
          %324 = sbr.rel (%p322) target = $region20
        $region19: #{tpu_custom_call.1} parent=11 // pred_region
          _
        $region20: #{tpu_custom_call.1} parent=11 // pred_fallthru
          _
        // Predicated region
        $region21: #{tpu_custom_call.1} parent=11 // pred_check
          %p325 = pneg %p110
        $region22: #{tpu_custom_call.1} parent=11 // pred_check_branch
          %327 = sbr.rel (%p325) target = $region24
        $region23: #{tpu_custom_call.1} parent=11 // pred_region
          _
        $region24: #{tpu_custom_call.1} parent=11 // pred_fallthru
          _
        // Predicated region
        $region25: #{tpu_custom_call.1} parent=11 // pred_check
          %p328 = pneg %p131
        $region26: #{tpu_custom_call.1} parent=11 // pred_check_branch
          %330 = sbr.rel (%p328) target = $region28
        $region27: #{tpu_custom_call.1} parent=11 // pred_region
          _
        $region28: #{tpu_custom_call.1} parent=11 // pred_fallthru
          _
        // Predicated region
        $region29: #{tpu_custom_call.1} parent=11 // pred_check
          %p331 = pneg %p152
        $region30: #{tpu_custom_call.1} parent=11 // pred_check_branch
          %333 = sbr.rel (%p331) target = $region32
        $region31: #{tpu_custom_call.1} parent=11 // pred_region
          _
        $region32: #{tpu_custom_call.1} parent=11 // pred_fallthru
          _
        // Predicated region
        $region33: #{tpu_custom_call.1} parent=11 // pred_check
          %p334 = pneg %p173
        $region34: #{tpu_custom_call.1} parent=11 // pred_check_branch
          %336 = sbr.rel (%p334) target = $region36
        $region35: #{tpu_custom_call.1} parent=11 // pred_region
          _
        $region36: #{tpu_custom_call.1} parent=11 // pred_fallthru
          _
        // Predicated region
        $region37: #{tpu_custom_call.1} parent=11 // pred_check
          %p337 = pneg %p194
        $region38: #{tpu_custom_call.1} parent=11 // pred_check_branch
          %339 = sbr.rel (%p337) target = $region40
        $region39: #{tpu_custom_call.1} parent=11 // pred_region
          _
        $region40: #{tpu_custom_call.1} parent=11 // pred_fallthru
          _
        // Predicated region
        $region41: #{tpu_custom_call.1} parent=11 // pred_check
          %p340 = pneg %p215
        $region42: #{tpu_custom_call.1} parent=11 // pred_check_branch
          %342 = sbr.rel (%p340) target = $region44
        $region43: #{tpu_custom_call.1} parent=11 // pred_region
          _
        $region44: #{tpu_custom_call.1} parent=11 // pred_fallthru
          _
        // Predicated region
        $region45: #{tpu_custom_call.1} parent=11 // pred_check
          %p343 = pneg %p236
        $region46: #{tpu_custom_call.1} parent=11 // pred_check_branch
          %345 = sbr.rel (%p343) target = $region48
        $region47: #{tpu_custom_call.1} parent=11 // pred_region
          _
        $region48: #{tpu_custom_call.1} parent=11 // pred_fallthru
          _
        // Predicated region
        $region49: #{tpu_custom_call.1} parent=11 // pred_check
          %p346 = pneg %p257
        $region50: #{tpu_custom_call.1} parent=11 // pred_check_branch
          %348 = sbr.rel (%p346) target = $region52
        $region51: #{tpu_custom_call.1} parent=11 // pred_region
          _
        $region52: #{tpu_custom_call.1} parent=11 // pred_fallthru
          _
        // Predicated region
        $region53: #{tpu_custom_call.1} parent=11 // pred_check
          %p349 = pneg %p278
        $region54: #{tpu_custom_call.1} parent=11 // pred_check_branch
          %351 = sbr.rel (%p349) target = $region56
        $region55: #{tpu_custom_call.1} parent=11 // pred_region
          _
        $region56: #{tpu_custom_call.1} parent=11 // pred_fallthru
          _
      $region12: #{tpu_custom_call.1} parent=5 // pred_fallthru
        _
      %p352 = scmp.lt.s32.totalorder %s21, 2
      // Predicated region
      $region57: #{tpu_custom_call.1} parent=5 // pred_check
        %p353 = pneg %p352
      $region58: #{tpu_custom_call.1} parent=5 // pred_check_branch
        %355 = sbr.rel (%p353) target = $region60
      $region59: #{tpu_custom_call.1} parent=5 // pred_region
        // Predicated region
        $region61: #{tpu_custom_call.1} parent=59 // pred_check
          %p356 = pneg %p41
        $region62: #{tpu_custom_call.1} parent=59 // pred_check_branch
          %358 = sbr.rel (%p356) target = $region64
        $region63: #{tpu_custom_call.1} parent=59 // pred_region
          %p359 = scmp.lt.s32.totalorder %s21, 1
          %s360 = scalar_select %p359, %s21, 1
          %s361 = smul.addr %s360, 2
          %s362 = smul.addr %s361, 8
          %s363 = scalar_lea.vmem %s0, %s362
        $region64: #{tpu_custom_call.1} parent=59 // pred_fallthru
          _
      $region60: #{tpu_custom_call.1} parent=5 // pred_fallthru
        _
      %p364 = scmp.le.s32.totalorder 1, %s21
      %p365 = scmp.lt.s32.totalorder %s21, 3
      %p366 = pnand %p364, %p365
      %p367 = pneg %p366
      // Predicated region
      $region65: #{tpu_custom_call.1} parent=5 // pred_check
        _
      $region66: #{tpu_custom_call.1} parent=5 // pred_check_branch
        %369 = sbr.rel (%p366) target = $region68
      $region67: #{tpu_custom_call.1} parent=5 // pred_region
        %s370 = ssub.s32 %s21, 1
        %p371 = scmp.lt.s32.totalorder %s26, 1
        %s372 = scalar_select %p371, %s26, 1
        %s373 = smul.addr %s372, 2
        %s374 = smul.addr %s373, 8
        %s375 = scalar_lea.vmem %s0, %s374
        %p376 = pneg %p47
        %p377 = pneg %p44
        %p378 = pneg %p68
        %p379 = pneg %p65
        %p380 = pneg %p89
        %p381 = pneg %p86
        %p382 = pneg %p110
        %p383 = pneg %p107
        %p384 = pneg %p131
        %p385 = pneg %p128
        %p386 = pneg %p152
        %p387 = pneg %p149
        %p388 = pneg %p173
        %p389 = pneg %p170
        %p390 = pneg %p194
        %p391 = pneg %p191
        %p392 = pneg %p215
        %p393 = pneg %p212
        %p394 = pneg %p236
        %p395 = pneg %p233
        %p396 = pneg %p257
        %p397 = pneg %p254
        %p398 = pneg %p278
        %p399 = pneg %p275
        %p400 = pneg %p304
        %p401 = pneg %p301
        %s402 = sand.u32 %s291, 1
        %s403 = scalar_lea.sflag [#allocation3], %s402
        %s404 = sand.u32 %s291, 1
        %s405 = smul.addr %s404, 16
        %s406 = scalar_lea.vmem [#allocation2], %s405
        %p407 = scmp.lt.s32.totalorder %s26, 1
        %s408 = scalar_select %p407, %s26, 1
        %s409 = smul.addr %s408, 2
        %s410 = smul.addr %s409, 8
        %s411 = scalar_lea.vmem %s0, %s410
        %v412 = vld [vmem:[%s411] sm:$0xff]
        %v413 = vld [vmem:[%s411 + $0x8] sm:$0xff]
        %v414 = vld [vmem:[%s1] sm:$0xff]
        %v415 = vld [vmem:[%s1 + $0x8] sm:$0xff]
        %v416 = vld [vmem:[%s1 + $0x10] sm:$0xff]
        %v417 = vld [vmem:[%s1 + $0x18] sm:$0xff]
        %v418 = vld [vmem:[%s1 + $0x20] sm:$0xff]
        %v419 = vld [vmem:[%s1 + $0x28] sm:$0xff]
        %v420 = vld [vmem:[%s1 + $0x30] sm:$0xff]
        %v421 = vld [vmem:[%s1 + $0x38] sm:$0xff]
        %v422 = vld [vmem:[%s2] sm:$0x1]
        %v424 = vperm.slane %v422, 0
        %vm426 = vcmask 523264
        %v428 = vsel %vm426, %v412, 0
        %v431 = vsel %vm426, %v413, 0
        %433 = vmatpush.msra.mxu0 0.0
        %434 = vmatpush.msra.mxu0 0.0
        %435 = vmatpush.msra.mxu0 0.0
        %436 = vmatpush.msra.mxu0 0.0
        %437 = vmatpush.msra.mxu0 0.0
        %438 = vmatpush.msra.mxu0 0.0
        %439 = vmatpush.msra.mxu0 0.0
        %440 = vmatpush.msra.mxu0 0.0
        %441 = vmatpush.msra.mxu0 %v421
        %442 = vmatpush.msra.mxu0 %v420
        %443 = vmatpush.msra.mxu0 %v419
        %444 = vmatpush.msra.mxu0 %v418
        %445 = vmatpush.msra.mxu0 %v417
        %446 = vmatpush.msra.mxu0 %v416
        %447 = vmatpush.msra.mxu0 %v415
        %448 = vmatpush.msra.mxu0 %v414
        %449 = vmatmul.f32.gmra.mxu0 %v428
        %v450 = vpop.f32.mrf.mxu0
        %v451 = vadd.f32 %v424, %v450
        %452 = vmatmul.f32.gmra.mxu0 %v431
        %v453 = vpop.f32.mrf.mxu0
        %v454 = vadd.f32 %v424, %v453
        %455 = vdwg.mxu0
        %v456 = vld [vmem:[%s3] sm:$0xff]
        %v457 = vld [vmem:[%s3 + $0x8] sm:$0xff]
        %v458 = vadd.f32 %v451, %v456
        %v459 = vadd.f32 %v454, %v457
        %v460 = vld [vmem:[%s4] sm:$0xf]
        %v461 = vld [vmem:[%s5] sm:$0xff]
        %v462 = vld [vmem:[%s5 + $0x8] sm:$0xff]
        %v463 = vld [vmem:[%s5 + $0x10] sm:$0xff]
        %v464 = vld [vmem:[%s5 + $0x18] sm:$0xff]
        %v465 = vld [vmem:[%s6] sm:$0x1]
        %vm466 = vcmask 261120
        %v467 = vsel %vm466, %v458, 0.0
        %468 = vadd.xlane.f32.xlu0 %v467
        %v469 = vpop.xlane.xlu0 %468
        %v470 = vsel %vm466, %v459, 0.0
        %471 = vadd.xlane.f32.xlu0 %v470
        %v472 = vpop.xlane.xlu0 %471
        %v473 = vrcp.pop 32.0
        %v474 = vmul.f32 32.0, %v473
        %v475 = vsub.f32 1.0, %v474
        %v476 = vmul.f32 %v473, %v475
        %v477 = vadd.f32 %v473, %v476
        %vm478 = vweird.f32 %v473
        %v479 = vsel %vm478, %v473, %v477
        %v480 = vmul.f32 %v469, %v479
        %v481 = vmul.f32 %v472, %v479
        %v482 = vsub.f32 %v458, %v480
        %v483 = vsub.f32 %v459, %v481
        %v484 = vmul.f32 %v482, %v482
        %v485 = vmul.f32 %v483, %v483
        %v486 = vsel %vm466, %v484, 0.0
        %487 = vadd.xlane.f32.xlu0 %v486
        %v488 = vpop.xlane.xlu0 %487
        %v489 = vsel %vm466, %v485, 0.0
        %490 = vadd.xlane.f32.xlu0 %v489
        %v491 = vpop.xlane.xlu0 %490
        %v492 = vmul.f32 %v488, %v479
        %v493 = vmul.f32 %v491, %v479
        %v494 = vadd.f32 %v492, 1e-06
        %v495 = vadd.f32 %v493, 1e-06
        %v496 = vrsqrt.pop %v494
        %v497 = vmul.f32 %v496, %v494
        %v498 = vmul.f32 %v497, %v496
        %v499 = vmul.f32 0.5, %v498
        %v500 = vsub.f32 1.5, %v499
        %v501 = vmul.f32 %v496, %v500
        %vm502 = vweird.f32 %v494
        %vm503 = vweird.f32 %v496
        %vm504 = vmor %vm502, %vm503
        %v505 = vsel %vm504, %v496, %v501
        %v506 = vrsqrt.pop %v495
        %v507 = vmul.f32 %v506, %v495
        %v508 = vmul.f32 %v507, %v506
        %v509 = vmul.f32 0.5, %v508
        %v510 = vsub.f32 1.5, %v509
        %v511 = vmul.f32 %v506, %v510
        %vm512 = vweird.f32 %v495
        %vm513 = vweird.f32 %v506
        %vm514 = vmor %vm512, %vm513
        %v515 = vsel %vm514, %v506, %v511
        %v516 = vmul.f32 %v482, %v505
        %v517 = vmul.f32 %v483, %v515
        %v518 = vperm.slane %v460, 0
        %v519 = vmul.f32 %v516, %v518
        %v520 = vmul.f32 %v517, %v518
        %v521 = vperm.slane %v460, 1
        %v522 = vadd.f32 %v519, %v521
        %v523 = vadd.f32 %v520, %v521
        %v525 = vperm.slane %v465, 0
        %v528 = vsel %vm466, %v522, 0
        %v531 = vsel %vm466, %v523, 0
        %533 = vmatpush.msra.mxu0 0.0
        %534 = vmatpush.msra.mxu0 0.0
        %535 = vmatpush.msra.mxu0 0.0
        %536 = vmatpush.msra.mxu0 0.0
        %537 = vmatpush.msra.mxu0 0.0
        %538 = vmatpush.msra.mxu0 0.0
        %539 = vmatpush.msra.mxu0 0.0
        %540 = vmatpush.msra.mxu0 0.0
        %541 = vmatpush.msra.mxu0 0.0
        %542 = vmatpush.msra.mxu0 0.0
        %543 = vmatpush.msra.mxu0 0.0
        %544 = vmatpush.msra.mxu0 0.0
        %545 = vmatpush.msra.mxu0 %v464
        %546 = vmatpush.msra.mxu0 %v463
        %547 = vmatpush.msra.mxu0 %v462
        %548 = vmatpush.msra.mxu0 %v461
        %549 = vmatmul.f32.gmra.mxu0 %v528
        %v550 = vpop.f32.mrf.mxu0
        %v551 = vadd.f32 %v525, %v550
        %552 = vmatmul.f32.gmra.mxu0 %v531
        %v553 = vpop.f32.mrf.mxu0
        %v554 = vadd.f32 %v525, %v553
        %555 = vdwg.mxu0
        %556 = vrot.lane.b32.xlu0 %v525, 32
        %v557 = vpop.permute.xlu0 %556
        %v559 = vadd.f32 %v458, %v557
        %v560 = vadd.f32 %v459, %v557
        %563 = vrot.lane.b32.xlu0 %v551, 96
        %v564 = vpop.permute.xlu0 %563
        %565 = vrot.lane.b32.xlu0 %v554, 96
        %v566 = vpop.permute.xlu0 %565
        %vm567 = vcmask 64512
        %v568 = vsel %vm567, %v551, 0
        %v570 = vsel %vm567, %v554, 0
        %v572 = vsel %vm567, %v564, 0
        %v574 = vsel %vm567, %v566, 0
        %576 = vmatpush.xpose.msra.mxu0 0.0
        %577 = vmatpush.xpose.msra.mxu0 0.0
        %578 = vmatpush.xpose.msra.mxu0 0.0
        %579 = vmatpush.xpose.msra.mxu0 0.0
        %580 = vmatpush.xpose.msra.mxu0 0.0
        %581 = vmatpush.xpose.msra.mxu0 0.0
        %582 = vmatpush.xpose.msra.mxu0 0.0
        %583 = vmatpush.xpose.msra.mxu0 0.0
        %584 = vmatpush.xpose.msra.mxu0 0.0
        %585 = vmatpush.xpose.msra.mxu0 0.0
        %586 = vmatpush.xpose.msra.mxu0 0.0
        %587 = vmatpush.xpose.msra.mxu0 0.0
        %588 = vmatpush.xpose.msra.mxu0 0.0
        %589 = vmatpush.xpose.msra.mxu0 0.0
        %590 = vmatpush.xpose.msra.mxu0 %v574
        %591 = vmatpush.xpose.msra.mxu0 %v572
        %592 = vmatmul.f32.gmra.mxu0 %v568
        %v593 = vpop.f32.mrf.mxu0
        %v594 = vadd.f32 0.0, %v593
        %595 = vmatmul.f32.gmra.mxu0 %v570
        %v596 = vpop.f32.mrf.mxu0
        %v597 = vadd.f32 0.0, %v596
        %598 = vdwg.mxu0
        %vm599 = vcmask 130048
        %v600 = vsel %vm599, %v594, -inf
        %601 = vmax.xlane.f32.xlu0 %v600
        %v602 = vpop.xlane.xlu0 %601
        %v603 = vsel %vm599, %v597, -inf
        %604 = vmax.xlane.f32.xlu0 %v603
        %v605 = vpop.xlane.xlu0 %604
        %v606 = vsub.f32 %v594, %v602
        %v607 = vsub.f32 %v597, %v605
        %v608 = vmul.f32 %v606, 1.442695
        %v609 = vpow.pop %v608
        %v610 = vmul.f32 %v607, 1.442695
        %v611 = vpow.pop %v610
        %v612 = vsel %vm599, %v609, 0.0
        %613 = vadd.xlane.f32.xlu0 %v612
        %v614 = vpop.xlane.xlu0 %613
        %v615 = vsel %vm599, %v611, 0.0
        %616 = vadd.xlane.f32.xlu0 %v615
        %v617 = vpop.xlane.xlu0 %616
        %v618 = vrcp.pop %v614
        %v619 = vmul.f32 %v614, %v618
        %v620 = vsub.f32 1.0, %v619
        %v621 = vmul.f32 %v618, %v620
        %v622 = vadd.f32 %v618, %v621
        %vm623 = vweird.f32 %v614
        %vm624 = vweird.f32 %v618
        %vm625 = vmor %vm623, %vm624
        %v626 = vsel %vm625, %v618, %v622
        %v627 = vand.u32 2147483647, %v614
        %vm628 = vcmp.eq.f32.partialorder %v627, 8.507059e+37
        %v629 = vand.u32 %v614, 2147483648
        %v630 = vor.u32 1.1754944e-38, %v629
        %v631 = vsel %vm628, %v630, %v626
        %v632 = vmul.f32 %v609, %v631
        %v633 = vrcp.pop %v617
        %v634 = vmul.f32 %v617, %v633
        %v635 = vsub.f32 1.0, %v634
        %v636 = vmul.f32 %v633, %v635
        %v637 = vadd.f32 %v633, %v636
        %vm638 = vweird.f32 %v617
        %vm639 = vweird.f32 %v633
        %vm640 = vmor %vm638, %vm639
        %v641 = vsel %vm640, %v633, %v637
        %v642 = vand.u32 2147483647, %v617
        %vm643 = vcmp.eq.f32.partialorder %v642, 8.507059e+37
        %v644 = vand.u32 %v617, 2147483648
        %v645 = vor.u32 1.1754944e-38, %v644
        %v646 = vsel %vm643, %v645, %v641
        %v647 = vmul.f32 %v611, %v646
        %648 = vrot.lane.b32.xlu0 %v551, 64
        %v649 = vpop.permute.xlu0 %648
        %650 = vrot.lane.b32.xlu0 %v554, 64
        %v651 = vpop.permute.xlu0 %650
        %v655 = vsel %vm599, %v632, 0
        %v658 = vsel %vm599, %v647, 0
        %660 = vmatpush.msra.mxu0 0.0
        %661 = vmatpush.msra.mxu0 0.0
        %662 = vmatpush.msra.mxu0 0.0
        %663 = vmatpush.msra.mxu0 0.0
        %664 = vmatpush.msra.mxu0 0.0
        %665 = vmatpush.msra.mxu0 0.0
        %666 = vmatpush.msra.mxu0 0.0
        %667 = vmatpush.msra.mxu0 0.0
        %668 = vmatpush.msra.mxu0 0.0
        %669 = vmatpush.msra.mxu0 0.0
        %670 = vmatpush.msra.mxu0 0.0
        %671 = vmatpush.msra.mxu0 0.0
        %672 = vmatpush.msra.mxu0 0.0
        %673 = vmatpush.msra.mxu0 0.0
        %674 = vmatpush.msra.mxu0 %v651
        %675 = vmatpush.msra.mxu0 %v649
        %676 = vmatmul.f32.gmra.mxu0 %v655
        %v677 = vpop.f32.mrf.mxu0
        %v678 = vadd.f32 0.0, %v677
        %679 = vmatmul.f32.gmra.mxu0 %v658
        %v680 = vpop.f32.mrf.mxu0
        %v681 = vadd.f32 0.0, %v680
        %682 = vdwg.mxu0
        %684 = vrot.lane.b32.xlu0 %v461, 32
        %v685 = vpop.permute.xlu0 %684
        %v688 = vsel %vm567, %v678, 0
        %v691 = vsel %vm567, %v681, 0
        %693 = vmatpush.msra.mxu0 0.0
        %694 = vmatpush.msra.mxu0 0.0
        %695 = vmatpush.msra.mxu0 0.0
        %696 = vmatpush.msra.mxu0 0.0
        %697 = vmatpush.msra.mxu0 0.0
        %698 = vmatpush.msra.mxu0 0.0
        %699 = vmatpush.msra.mxu0 0.0
        %700 = vmatpush.msra.mxu0 0.0
        %701 = vmatpush.msra.mxu0 0.0
        %702 = vmatpush.msra.mxu0 0.0
        %703 = vmatpush.msra.mxu0 0.0
        %704 = vmatpush.msra.mxu0 0.0
        %705 = vmatpush.msra.mxu0 0.0
        %706 = vmatpush.msra.mxu0 0.0
        %707 = vmatpush.msra.mxu0 0.0
        %708 = vmatpush.msra.mxu0 %v685
        %709 = vmatmul.f32.gmra.mxu0 %v688
        %v710 = vpop.f32.mrf.mxu0
        %v711 = vadd.f32 0.0, %v710
        %712 = vmatmul.f32.gmra.mxu0 %v691
        %v713 = vpop.f32.mrf.mxu0
        %v714 = vadd.f32 0.0, %v713
        %715 = vdwg.mxu0
        %v716 = vadd.f32 %v559, %v711
        %v717 = vadd.f32 %v560, %v714
        %718 = vrot.lane.b32.xlu0 %v551, 120
        %v719 = vpop.permute.xlu0 %718
        %720 = vrot.lane.b32.xlu0 %v554, 120
        %v721 = vpop.permute.xlu0 %720
        %722 = vrot.lane.b32.xlu0 %v551, 88
        %v723 = vpop.permute.xlu0 %722
        %724 = vrot.lane.b32.xlu0 %v554, 88
        %v725 = vpop.permute.xlu0 %724
        %v726 = vsel %vm567, %v719, 0
        %v728 = vsel %vm567, %v721, 0
        %v730 = vsel %vm567, %v723, 0
        %v732 = vsel %vm567, %v725, 0
        %734 = vmatpush.xpose.msra.mxu0 0.0
        %735 = vmatpush.xpose.msra.mxu0 0.0
        %736 = vmatpush.xpose.msra.mxu0 0.0
        %737 = vmatpush.xpose.msra.mxu0 0.0
        %738 = vmatpush.xpose.msra.mxu0 0.0
        %739 = vmatpush.xpose.msra.mxu0 0.0
        %740 = vmatpush.xpose.msra.mxu0 0.0
        %741 = vmatpush.xpose.msra.mxu0 0.0
        %742 = vmatpush.xpose.msra.mxu0 0.0
        %743 = vmatpush.xpose.msra.mxu0 0.0
        %744 = vmatpush.xpose.msra.mxu0 0.0
        %745 = vmatpush.xpose.msra.mxu0 0.0
        %746 = vmatpush.xpose.msra.mxu0 0.0
        %747 = vmatpush.xpose.msra.mxu0 0.0
        %748 = vmatpush.xpose.msra.mxu0 %v732
        %749 = vmatpush.xpose.msra.mxu0 %v730
        %750 = vmatmul.f32.gmra.mxu0 %v726
        %v751 = vpop.f32.mrf.mxu0
        %v752 = vadd.f32 0.0, %v751
        %753 = vmatmul.f32.gmra.mxu0 %v728
        %v754 = vpop.f32.mrf.mxu0
        %v755 = vadd.f32 0.0, %v754
        %756 = vdwg.mxu0
        %v757 = vsel %vm599, %v752, -inf
        %758 = vmax.xlane.f32.xlu0 %v757
        %v759 = vpop.xlane.xlu0 %758
        %v760 = vsel %vm599, %v755, -inf
        %761 = vmax.xlane.f32.xlu0 %v760
        %v762 = vpop.xlane.xlu0 %761
        %v763 = vsub.f32 %v752, %v759
        %v764 = vsub.f32 %v755, %v762
        %v765 = vmul.f32 %v763, 1.442695
        %v766 = vpow.pop %v765
        %v767 = vmul.f32 %v764, 1.442695
        %v768 = vpow.pop %v767
        %v769 = vsel %vm599, %v766, 0.0
        %770 = vadd.xlane.f32.xlu0 %v769
        %v771 = vpop.xlane.xlu0 %770
        %v772 = vsel %vm599, %v768, 0.0
        %773 = vadd.xlane.f32.xlu0 %v772
        %v774 = vpop.xlane.xlu0 %773
        %v775 = vrcp.pop %v771
        %v776 = vmul.f32 %v771, %v775
        %v777 = vsub.f32 1.0, %v776
        %v778 = vmul.f32 %v775, %v777
        %v779 = vadd.f32 %v775, %v778
        %vm780 = vweird.f32 %v771
        %vm781 = vweird.f32 %v775
        %vm782 = vmor %vm780, %vm781
        %v783 = vsel %vm782, %v775, %v779
        %v784 = vand.u32 2147483647, %v771
        %vm785 = vcmp.eq.f32.partialorder %v784, 8.507059e+37
        %v786 = vand.u32 %v771, 2147483648
        %v787 = vor.u32 1.1754944e-38, %v786
        %v788 = vsel %vm785, %v787, %v783
        %v789 = vmul.f32 %v766, %v788
        %v790 = vrcp.pop %v774
        %v791 = vmul.f32 %v774, %v790
        %v792 = vsub.f32 1.0, %v791
        %v793 = vmul.f32 %v790, %v792
        %v794 = vadd.f32 %v790, %v793
        %vm795 = vweird.f32 %v774
        %vm796 = vweird.f32 %v790
        %vm797 = vmor %vm795, %vm796
        %v798 = vsel %vm797, %v790, %v794
        %v799 = vand.u32 2147483647, %v774
        %vm800 = vcmp.eq.f32.partialorder %v799, 8.507059e+37
        %v801 = vand.u32 %v774, 2147483648
        %v802 = vor.u32 1.1754944e-38, %v801
        %v803 = vsel %vm800, %v802, %v798
        %v804 = vmul.f32 %v768, %v803
        %805 = vrot.lane.b32.xlu0 %v551, 56
        %v806 = vpop.permute.xlu0 %805
        %807 = vrot.lane.b32.xlu0 %v554, 56
        %v808 = vpop.permute.xlu0 %807
        %v812 = vsel %vm599, %v789, 0
        %v815 = vsel %vm599, %v804, 0
        %817 = vmatpush.msra.mxu0 0.0
        %818 = vmatpush.msra.mxu0 0.0
        %819 = vmatpush.msra.mxu0 0.0
        %820 = vmatpush.msra.mxu0 0.0
        %821 = vmatpush.msra.mxu0 0.0
        %822 = vmatpush.msra.mxu0 0.0
        %823 = vmatpush.msra.mxu0 0.0
        %824 = vmatpush.msra.mxu0 0.0
        %825 = vmatpush.msra.mxu0 0.0
        %826 = vmatpush.msra.mxu0 0.0
        %827 = vmatpush.msra.mxu0 0.0
        %828 = vmatpush.msra.mxu0 0.0
        %829 = vmatpush.msra.mxu0 0.0
        %830 = vmatpush.msra.mxu0 0.0
        %831 = vmatpush.msra.mxu0 %v808
        %832 = vmatpush.msra.mxu0 %v806
        %833 = vmatmul.f32.gmra.mxu0 %v812
        %v834 = vpop.f32.mrf.mxu0
        %v835 = vadd.f32 0.0, %v834
        %836 = vmatmul.f32.gmra.mxu0 %v815
        %v837 = vpop.f32.mrf.mxu0
        %v838 = vadd.f32 0.0, %v837
        %839 = vdwg.mxu0
        %841 = vrot.lane.b32.xlu0 %v462, 32
        %v842 = vpop.permute.xlu0 %841
        %v845 = vsel %vm567, %v835, 0
        %v848 = vsel %vm567, %v838, 0
        %850 = vmatpush.msra.mxu0 0.0
        %851 = vmatpush.msra.mxu0 0.0
        %852 = vmatpush.msra.mxu0 0.0
        %853 = vmatpush.msra.mxu0 0.0
        %854 = vmatpush.msra.mxu0 0.0
        %855 = vmatpush.msra.mxu0 0.0
        %856 = vmatpush.msra.mxu0 0.0
        %857 = vmatpush.msra.mxu0 0.0
        %858 = vmatpush.msra.mxu0 0.0
        %859 = vmatpush.msra.mxu0 0.0
        %860 = vmatpush.msra.mxu0 0.0
        %861 = vmatpush.msra.mxu0 0.0
        %862 = vmatpush.msra.mxu0 0.0
        %863 = vmatpush.msra.mxu0 0.0
        %864 = vmatpush.msra.mxu0 0.0
        %865 = vmatpush.msra.mxu0 %v842
        %866 = vmatmul.f32.gmra.mxu0 %v845
        %v867 = vpop.f32.mrf.mxu0
        %v868 = vadd.f32 0.0, %v867
        %869 = vmatmul.f32.gmra.mxu0 %v848
        %v870 = vpop.f32.mrf.mxu0
        %v871 = vadd.f32 0.0, %v870
        %872 = vdwg.mxu0
        %v873 = vadd.f32 %v716, %v868
        %v874 = vadd.f32 %v717, %v871
        %875 = vrot.lane.b32.xlu0 %v551, 112
        %v876 = vpop.permute.xlu0 %875
        %877 = vrot.lane.b32.xlu0 %v554, 112
        %v878 = vpop.permute.xlu0 %877
        %879 = vrot.lane.b32.xlu0 %v551, 80
        %v880 = vpop.permute.xlu0 %879
        %881 = vrot.lane.b32.xlu0 %v554, 80
        %v882 = vpop.permute.xlu0 %881
        %v883 = vsel %vm567, %v876, 0
        %v885 = vsel %vm567, %v878, 0
        %v887 = vsel %vm567, %v880, 0
        %v889 = vsel %vm567, %v882, 0
        %891 = vmatpush.xpose.msra.mxu0 0.0
        %892 = vmatpush.xpose.msra.mxu0 0.0
        %893 = vmatpush.xpose.msra.mxu0 0.0
        %894 = vmatpush.xpose.msra.mxu0 0.0
        %895 = vmatpush.xpose.msra.mxu0 0.0
        %896 = vmatpush.xpose.msra.mxu0 0.0
        %897 = vmatpush.xpose.msra.mxu0 0.0
        %898 = vmatpush.xpose.msra.mxu0 0.0
        %899 = vmatpush.xpose.msra.mxu0 0.0
        %900 = vmatpush.xpose.msra.mxu0 0.0
        %901 = vmatpush.xpose.msra.mxu0 0.0
        %902 = vmatpush.xpose.msra.mxu0 0.0
        %903 = vmatpush.xpose.msra.mxu0 0.0
        %904 = vmatpush.xpose.msra.mxu0 0.0
        %905 = vmatpush.xpose.msra.mxu0 %v889
        %906 = vmatpush.xpose.msra.mxu0 %v887
        %907 = vmatmul.f32.gmra.mxu0 %v883
        %v908 = vpop.f32.mrf.mxu0
        %v909 = vadd.f32 0.0, %v908
        %910 = vmatmul.f32.gmra.mxu0 %v885
        %v911 = vpop.f32.mrf.mxu0
        %v912 = vadd.f32 0.0, %v911
        %913 = vdwg.mxu0
        %v914 = vsel %vm599, %v909, -inf
        %915 = vmax.xlane.f32.xlu0 %v914
        %v916 = vpop.xlane.xlu0 %915
        %v917 = vsel %vm599, %v912, -inf
        %918 = vmax.xlane.f32.xlu0 %v917
        %v919 = vpop.xlane.xlu0 %918
        %v920 = vsub.f32 %v909, %v916
        %v921 = vsub.f32 %v912, %v919
        %v922 = vmul.f32 %v920, 1.442695
        %v923 = vpow.pop %v922
        %v924 = vmul.f32 %v921, 1.442695
        %v925 = vpow.pop %v924
        %v926 = vsel %vm599, %v923, 0.0
        %927 = vadd.xlane.f32.xlu0 %v926
        %v928 = vpop.xlane.xlu0 %927
        %v929 = vsel %vm599, %v925, 0.0
        %930 = vadd.xlane.f32.xlu0 %v929
        %v931 = vpop.xlane.xlu0 %930
        %v932 = vrcp.pop %v928
        %v933 = vmul.f32 %v928, %v932
        %v934 = vsub.f32 1.0, %v933
        %v935 = vmul.f32 %v932, %v934
        %v936 = vadd.f32 %v932, %v935
        %vm937 = vweird.f32 %v928
        %vm938 = vweird.f32 %v932
        %vm939 = vmor %vm937, %vm938
        %v940 = vsel %vm939, %v932, %v936
        %v941 = vand.u32 2147483647, %v928
        %vm942 = vcmp.eq.f32.partialorder %v941, 8.507059e+37
        %v943 = vand.u32 %v928, 2147483648
        %v944 = vor.u32 1.1754944e-38, %v943
        %v945 = vsel %vm942, %v944, %v940
        %v946 = vmul.f32 %v923, %v945
        %v947 = vrcp.pop %v931
        %v948 = vmul.f32 %v931, %v947
        %v949 = vsub.f32 1.0, %v948
        %v950 = vmul.f32 %v947, %v949
        %v951 = vadd.f32 %v947, %v950
        %vm952 = vweird.f32 %v931
        %vm953 = vweird.f32 %v947
        %vm954 = vmor %vm952, %vm953
        %v955 = vsel %vm954, %v947, %v951
        %v956 = vand.u32 2147483647, %v931
        %vm957 = vcmp.eq.f32.partialorder %v956, 8.507059e+37
        %v958 = vand.u32 %v931, 2147483648
        %v959 = vor.u32 1.1754944e-38, %v958
        %v960 = vsel %vm957, %v959, %v955
        %v961 = vmul.f32 %v925, %v960
        %962 = vrot.lane.b32.xlu0 %v551, 48
        %v963 = vpop.permute.xlu0 %962
        %964 = vrot.lane.b32.xlu0 %v554, 48
        %v965 = vpop.permute.xlu0 %964
        %v969 = vsel %vm599, %v946, 0
        %v972 = vsel %vm599, %v961, 0
        %974 = vmatpush.msra.mxu0 0.0
        %975 = vmatpush.msra.mxu0 0.0
        %976 = vmatpush.msra.mxu0 0.0
        %977 = vmatpush.msra.mxu0 0.0
        %978 = vmatpush.msra.mxu0 0.0
        %979 = vmatpush.msra.mxu0 0.0
        %980 = vmatpush.msra.mxu0 0.0
        %981 = vmatpush.msra.mxu0 0.0
        %982 = vmatpush.msra.mxu0 0.0
        %983 = vmatpush.msra.mxu0 0.0
        %984 = vmatpush.msra.mxu0 0.0
        %985 = vmatpush.msra.mxu0 0.0
        %986 = vmatpush.msra.mxu0 0.0
        %987 = vmatpush.msra.mxu0 0.0
        %988 = vmatpush.msra.mxu0 %v965
        %989 = vmatpush.msra.mxu0 %v963
        %990 = vmatmul.f32.gmra.mxu0 %v969
        %v991 = vpop.f32.mrf.mxu0
        %v992 = vadd.f32 0.0, %v991
        %993 = vmatmul.f32.gmra.mxu0 %v972
        %v994 = vpop.f32.mrf.mxu0
        %v995 = vadd.f32 0.0, %v994
        %996 = vdwg.mxu0
        %998 = vrot.lane.b32.xlu0 %v463, 32
        %v999 = vpop.permute.xlu0 %998
        %v1002 = vsel %vm567, %v992, 0
        %v1005 = vsel %vm567, %v995, 0
        %1007 = vmatpush.msra.mxu0 0.0
        %1008 = vmatpush.msra.mxu0 0.0
        %1009 = vmatpush.msra.mxu0 0.0
        %1010 = vmatpush.msra.mxu0 0.0
        %1011 = vmatpush.msra.mxu0 0.0
        %1012 = vmatpush.msra.mxu0 0.0
        %1013 = vmatpush.msra.mxu0 0.0
        %1014 = vmatpush.msra.mxu0 0.0
        %1015 = vmatpush.msra.mxu0 0.0
        %1016 = vmatpush.msra.mxu0 0.0
        %1017 = vmatpush.msra.mxu0 0.0
        %1018 = vmatpush.msra.mxu0 0.0
        %1019 = vmatpush.msra.mxu0 0.0
        %1020 = vmatpush.msra.mxu0 0.0
        %1021 = vmatpush.msra.mxu0 0.0
        %1022 = vmatpush.msra.mxu0 %v999
        %1023 = vmatmul.f32.gmra.mxu0 %v1002
        %v1024 = vpop.f32.mrf.mxu0
        %v1025 = vadd.f32 0.0, %v1024
        %1026 = vmatmul.f32.gmra.mxu0 %v1005
        %v1027 = vpop.f32.mrf.mxu0
        %v1028 = vadd.f32 0.0, %v1027
        %1029 = vdwg.mxu0
        %v1030 = vadd.f32 %v873, %v1025
        %v1031 = vadd.f32 %v874, %v1028
        %1032 = vrot.lane.b32.xlu0 %v551, 104
        %v1033 = vpop.permute.xlu0 %1032
        %1034 = vrot.lane.b32.xlu0 %v554, 104
        %v1035 = vpop.permute.xlu0 %1034
        %1036 = vrot.lane.b32.xlu0 %v551, 72
        %v1037 = vpop.permute.xlu0 %1036
        %1038 = vrot.lane.b32.xlu0 %v554, 72
        %v1039 = vpop.permute.xlu0 %1038
        %v1040 = vsel %vm567, %v1033, 0
        %v1042 = vsel %vm567, %v1035, 0
        %v1044 = vsel %vm567, %v1037, 0
        %v1046 = vsel %vm567, %v1039, 0
        %1048 = vmatpush.xpose.msra.mxu0 0.0
        %1049 = vmatpush.xpose.msra.mxu0 0.0
        %1050 = vmatpush.xpose.msra.mxu0 0.0
        %1051 = vmatpush.xpose.msra.mxu0 0.0
        %1052 = vmatpush.xpose.msra.mxu0 0.0
        %1053 = vmatpush.xpose.msra.mxu0 0.0
        %1054 = vmatpush.xpose.msra.mxu0 0.0
        %1055 = vmatpush.xpose.msra.mxu0 0.0
        %1056 = vmatpush.xpose.msra.mxu0 0.0
        %1057 = vmatpush.xpose.msra.mxu0 0.0
        %1058 = vmatpush.xpose.msra.mxu0 0.0
        %1059 = vmatpush.xpose.msra.mxu0 0.0
        %1060 = vmatpush.xpose.msra.mxu0 0.0
        %1061 = vmatpush.xpose.msra.mxu0 0.0
        %1062 = vmatpush.xpose.msra.mxu0 %v1046
        %1063 = vmatpush.xpose.msra.mxu0 %v1044
        %1064 = vmatmul.f32.gmra.mxu0 %v1040
        %v1065 = vpop.f32.mrf.mxu0
        %v1066 = vadd.f32 0.0, %v1065
        %1067 = vmatmul.f32.gmra.mxu0 %v1042
        %v1068 = vpop.f32.mrf.mxu0
        %v1069 = vadd.f32 0.0, %v1068
        %1070 = vdwg.mxu0
        %v1071 = vsel %vm599, %v1066, -inf
        %1072 = vmax.xlane.f32.xlu0 %v1071
        %v1073 = vpop.xlane.xlu0 %1072
        %v1074 = vsel %vm599, %v1069, -inf
        %1075 = vmax.xlane.f32.xlu0 %v1074
        %v1076 = vpop.xlane.xlu0 %1075
        %v1077 = vsub.f32 %v1066, %v1073
        %v1078 = vsub.f32 %v1069, %v1076
        %v1079 = vmul.f32 %v1077, 1.442695
        %v1080 = vpow.pop %v1079
        %v1081 = vmul.f32 %v1078, 1.442695
        %v1082 = vpow.pop %v1081
        %v1083 = vsel %vm599, %v1080, 0.0
        %1084 = vadd.xlane.f32.xlu0 %v1083
        %v1085 = vpop.xlane.xlu0 %1084
        %v1086 = vsel %vm599, %v1082, 0.0
        %1087 = vadd.xlane.f32.xlu0 %v1086
        %v1088 = vpop.xlane.xlu0 %1087
        %v1089 = vrcp.pop %v1085
        %v1090 = vmul.f32 %v1085, %v1089
        %v1091 = vsub.f32 1.0, %v1090
        %v1092 = vmul.f32 %v1089, %v1091
        %v1093 = vadd.f32 %v1089, %v1092
        %vm1094 = vweird.f32 %v1085
        %vm1095 = vweird.f32 %v1089
        %vm1096 = vmor %vm1094, %vm1095
        %v1097 = vsel %vm1096, %v1089, %v1093
        %v1098 = vand.u32 2147483647, %v1085
        %vm1099 = vcmp.eq.f32.partialorder %v1098, 8.507059e+37
        %v1100 = vand.u32 %v1085, 2147483648
        %v1101 = vor.u32 1.1754944e-38, %v1100
        %v1102 = vsel %vm1099, %v1101, %v1097
        %v1103 = vmul.f32 %v1080, %v1102
        %v1104 = vrcp.pop %v1088
        %v1105 = vmul.f32 %v1088, %v1104
        %v1106 = vsub.f32 1.0, %v1105
        %v1107 = vmul.f32 %v1104, %v1106
        %v1108 = vadd.f32 %v1104, %v1107
        %vm1109 = vweird.f32 %v1088
        %vm1110 = vweird.f32 %v1104
        %vm1111 = vmor %vm1109, %vm1110
        %v1112 = vsel %vm1111, %v1104, %v1108
        %v1113 = vand.u32 2147483647, %v1088
        %vm1114 = vcmp.eq.f32.partialorder %v1113, 8.507059e+37
        %v1115 = vand.u32 %v1088, 2147483648
        %v1116 = vor.u32 1.1754944e-38, %v1115
        %v1117 = vsel %vm1114, %v1116, %v1112
        %v1118 = vmul.f32 %v1082, %v1117
        %1119 = vrot.lane.b32.xlu0 %v551, 40
        %v1120 = vpop.permute.xlu0 %1119
        %1121 = vrot.lane.b32.xlu0 %v554, 40
        %v1122 = vpop.permute.xlu0 %1121
        %v1126 = vsel %vm599, %v1103, 0
        %v1129 = vsel %vm599, %v1118, 0
        %1131 = vmatpush.msra.mxu0 0.0
        %1132 = vmatpush.msra.mxu0 0.0
        %1133 = vmatpush.msra.mxu0 0.0
        %1134 = vmatpush.msra.mxu0 0.0
        %1135 = vmatpush.msra.mxu0 0.0
        %1136 = vmatpush.msra.mxu0 0.0
        %1137 = vmatpush.msra.mxu0 0.0
        %1138 = vmatpush.msra.mxu0 0.0
        %1139 = vmatpush.msra.mxu0 0.0
        %1140 = vmatpush.msra.mxu0 0.0
        %1141 = vmatpush.msra.mxu0 0.0
        %1142 = vmatpush.msra.mxu0 0.0
        %1143 = vmatpush.msra.mxu0 0.0
        %1144 = vmatpush.msra.mxu0 0.0
        %1145 = vmatpush.msra.mxu0 %v1122
        %1146 = vmatpush.msra.mxu0 %v1120
        %1147 = vmatmul.f32.gmra.mxu0 %v1126
        %v1148 = vpop.f32.mrf.mxu0
        %v1149 = vadd.f32 0.0, %v1148
        %1150 = vmatmul.f32.gmra.mxu0 %v1129
        %v1151 = vpop.f32.mrf.mxu0
        %v1152 = vadd.f32 0.0, %v1151
        %1153 = vdwg.mxu0
        %1155 = vrot.lane.b32.xlu0 %v464, 32
        %v1156 = vpop.permute.xlu0 %1155
        %v1159 = vsel %vm567, %v1149, 0
        %v1162 = vsel %vm567, %v1152, 0
        %1164 = vmatpush.msra.mxu0 0.0
        %1165 = vmatpush.msra.mxu0 0.0
        %1166 = vmatpush.msra.mxu0 0.0
        %1167 = vmatpush.msra.mxu0 0.0
        %1168 = vmatpush.msra.mxu0 0.0
        %1169 = vmatpush.msra.mxu0 0.0
        %1170 = vmatpush.msra.mxu0 0.0
        %1171 = vmatpush.msra.mxu0 0.0
        %1172 = vmatpush.msra.mxu0 0.0
        %1173 = vmatpush.msra.mxu0 0.0
        %1174 = vmatpush.msra.mxu0 0.0
        %1175 = vmatpush.msra.mxu0 0.0
        %1176 = vmatpush.msra.mxu0 0.0
        %1177 = vmatpush.msra.mxu0 0.0
        %1178 = vmatpush.msra.mxu0 0.0
        %1179 = vmatpush.msra.mxu0 %v1156
        %1180 = vmatmul.f32.gmra.mxu0 %v1159
        %v1181 = vpop.f32.mrf.mxu0
        %v1182 = vadd.f32 0.0, %v1181
        %1183 = vmatmul.f32.gmra.mxu0 %v1162
        %v1184 = vpop.f32.mrf.mxu0
        %v1185 = vadd.f32 0.0, %v1184
        %1186 = vdwg.mxu0
        %v1187 = vadd.f32 %v1030, %v1182
        %v1188 = vadd.f32 %v1031, %v1185
        %v1189 = vsel %vm466, %v1187, 0.0
        %1190 = vadd.xlane.f32.xlu0 %v1189
        %v1191 = vpop.xlane.xlu0 %1190
        %v1192 = vsel %vm466, %v1188, 0.0
        %1193 = vadd.xlane.f32.xlu0 %v1192
        %v1194 = vpop.xlane.xlu0 %1193
        %v1195 = vmul.f32 %v1191, %v479
        %v1196 = vmul.f32 %v1194, %v479
        %v1197 = vsub.f32 %v1187, %v1195
        %v1198 = vsub.f32 %v1188, %v1196
        %v1199 = vmul.f32 %v1197, %v1197
        %v1200 = vmul.f32 %v1198, %v1198
        %v1201 = vsel %vm466, %v1199, 0.0
        %1202 = vadd.xlane.f32.xlu0 %v1201
        %v1203 = vpop.xlane.xlu0 %1202
        %v1204 = vsel %vm466, %v1200, 0.0
        %1205 = vadd.xlane.f32.xlu0 %v1204
        %v1206 = vpop.xlane.xlu0 %1205
        %v1207 = vmul.f32 %v1203, %v479
        %v1208 = vmul.f32 %v1206, %v479
        %v1209 = vadd.f32 %v1207, 1e-06
        %v1210 = vadd.f32 %v1208, 1e-06
        %v1211 = vrsqrt.pop %v1209
        %v1212 = vmul.f32 %v1211, %v1209
        %v1213 = vmul.f32 %v1212, %v1211
        %v1214 = vmul.f32 0.5, %v1213
        %v1215 = vsub.f32 1.5, %v1214
        %v1216 = vmul.f32 %v1211, %v1215
        %vm1217 = vweird.f32 %v1209
        %vm1218 = vweird.f32 %v1211
        %vm1219 = vmor %vm1217, %vm1218
        %v1220 = vsel %vm1219, %v1211, %v1216
        %v1221 = vrsqrt.pop %v1210
        %v1222 = vmul.f32 %v1221, %v1210
        %v1223 = vmul.f32 %v1222, %v1221
        %v1224 = vmul.f32 0.5, %v1223
        %v1225 = vsub.f32 1.5, %v1224
        %v1226 = vmul.f32 %v1221, %v1225
        %vm1227 = vweird.f32 %v1210
        %vm1228 = vweird.f32 %v1221
        %vm1229 = vmor %vm1227, %vm1228
        %v1230 = vsel %vm1229, %v1221, %v1226
        %v1231 = vmul.f32 %v1197, %v1220
        %v1232 = vmul.f32 %v1198, %v1230
        %v1233 = vperm.slane %v460, 2
        %v1234 = vmul.f32 %v1231, %v1233
        %v1235 = vmul.f32 %v1232, %v1233
        %v1236 = vperm.slane %v460, 3
        %v1237 = vadd.f32 %v1234, %v1236
        %v1238 = vadd.f32 %v1235, %v1236
        %v1239 = vld [vmem:[%s7] sm:$0xff]
        %v1240 = vld [vmem:[%s7 + $0x8] sm:$0xff]
        %v1241 = vld [vmem:[%s7 + $0x10] sm:$0xff]
        %v1242 = vld [vmem:[%s7 + $0x18] sm:$0xff]
        %v1243 = vld [vmem:[%s8] sm:$0x1]
        %v1245 = vperm.slane %v1243, 0
        %v1248 = vsel %vm466, %v1237, 0
        %v1251 = vsel %vm466, %v1238, 0
        %1253 = vmatpush.msra.mxu0 0.0
        %1254 = vmatpush.msra.mxu0 0.0
        %1255 = vmatpush.msra.mxu0 0.0
        %1256 = vmatpush.msra.mxu0 0.0
        %1257 = vmatpush.msra.mxu0 0.0
        %1258 = vmatpush.msra.mxu0 0.0
        %1259 = vmatpush.msra.mxu0 0.0
        %1260 = vmatpush.msra.mxu0 0.0
        %1261 = vmatpush.msra.mxu0 0.0
        %1262 = vmatpush.msra.mxu0 0.0
        %1263 = vmatpush.msra.mxu0 0.0
        %1264 = vmatpush.msra.mxu0 0.0
        %1265 = vmatpush.msra.mxu0 %v1242
        %1266 = vmatpush.msra.mxu0 %v1241
        %1267 = vmatpush.msra.mxu0 %v1240
        %1268 = vmatpush.msra.mxu0 %v1239
        %1269 = vmatmul.f32.gmra.mxu0 %v1248
        %v1270 = vpop.f32.mrf.mxu0
        %v1271 = vadd.f32 %v1245, %v1270
        %1272 = vmatmul.f32.gmra.mxu0 %v1251
        %v1273 = vpop.f32.mrf.mxu0
        %v1274 = vadd.f32 %v1245, %v1273
        %1275 = vdwg.mxu0
        %v1276 = vmax.f32 %v1271, 0.0
        %v1277 = vmax.f32 %v1274, 0.0
        %v1278 = vld [vmem:[%s9] sm:$0xff]
        %v1279 = vld [vmem:[%s9 + $0x8] sm:$0xff]
        %v1280 = vld [vmem:[%s9 + $0x10] sm:$0xff]
        %v1281 = vld [vmem:[%s9 + $0x18] sm:$0xff]
        %v1282 = vld [vmem:[%s9 + $0x20] sm:$0xff]
        %v1283 = vld [vmem:[%s9 + $0x28] sm:$0xff]
        %v1284 = vld [vmem:[%s9 + $0x30] sm:$0xff]
        %v1285 = vld [vmem:[%s9 + $0x38] sm:$0xff]
        %v1286 = vld [vmem:[%s10] sm:$0x1]
        %v1288 = vperm.slane %v1286, 0
        %v1291 = vsel %vm426, %v1276, 0
        %v1294 = vsel %vm426, %v1277, 0
        %1296 = vmatpush.msra.mxu0 0.0
        %1297 = vmatpush.msra.mxu0 0.0
        %1298 = vmatpush.msra.mxu0 0.0
        %1299 = vmatpush.msra.mxu0 0.0
        %1300 = vmatpush.msra.mxu0 0.0
        %1301 = vmatpush.msra.mxu0 0.0
        %1302 = vmatpush.msra.mxu0 0.0
        %1303 = vmatpush.msra.mxu0 0.0
        %1304 = vmatpush.msra.mxu0 %v1285
        %1305 = vmatpush.msra.mxu0 %v1284
        %1306 = vmatpush.msra.mxu0 %v1283
        %1307 = vmatpush.msra.mxu0 %v1282
        %1308 = vmatpush.msra.mxu0 %v1281
        %1309 = vmatpush.msra.mxu0 %v1280
        %1310 = vmatpush.msra.mxu0 %v1279
        %1311 = vmatpush.msra.mxu0 %v1278
        %1312 = vmatmul.f32.gmra.mxu0 %v1291
        %v1313 = vpop.f32.mrf.mxu0
        %v1314 = vadd.f32 %v1288, %v1313
        %1315 = vmatmul.f32.gmra.mxu0 %v1294
        %v1316 = vpop.f32.mrf.mxu0
        %v1317 = vadd.f32 %v1288, %v1316
        %1318 = vdwg.mxu0
        %v1319 = vadd.f32 %v1314, %v1187
        %v1320 = vadd.f32 %v1317, %v1188
        %s1321 = scalar_lea.vmem %s4, 4
        %v1322 = vld [vmem:[%s1321] sm:$0xf]
        %s1323 = scalar_lea.vmem %s5, 32
        %v1324 = vld [vmem:[%s1323] sm:$0xff]
        %v1325 = vld [vmem:[%s1323 + $0x8] sm:$0xff]
        %v1326 = vld [vmem:[%s1323 + $0x10] sm:$0xff]
        %v1327 = vld [vmem:[%s1323 + $0x18] sm:$0xff]
        %s1328 = scalar_lea.vmem %s6, 1
        %v1329 = vld [vmem:[%s1328] sm:$0x1]
        %v1330 = vsel %vm466, %v1319, 0.0
        %1331 = vadd.xlane.f32.xlu0 %v1330
        %v1332 = vpop.xlane.xlu0 %1331
        %v1333 = vsel %vm466, %v1320, 0.0
        %1334 = vadd.xlane.f32.xlu0 %v1333
        %v1335 = vpop.xlane.xlu0 %1334
        %v1336 = vmul.f32 %v1332, %v479
        %v1337 = vmul.f32 %v1335, %v479
        %v1338 = vsub.f32 %v1319, %v1336
        %v1339 = vsub.f32 %v1320, %v1337
        %v1340 = vmul.f32 %v1338, %v1338
        %v1341 = vmul.f32 %v1339, %v1339
        %v1342 = vsel %vm466, %v1340, 0.0
        %1343 = vadd.xlane.f32.xlu0 %v1342
        %v1344 = vpop.xlane.xlu0 %1343
        %v1345 = vsel %vm466, %v1341, 0.0
        %1346 = vadd.xlane.f32.xlu0 %v1345
        %v1347 = vpop.xlane.xlu0 %1346
        %v1348 = vmul.f32 %v1344, %v479
        %v1349 = vmul.f32 %v1347, %v479
        %v1350 = vadd.f32 %v1348, 1e-06
        %v1351 = vadd.f32 %v1349, 1e-06
        %v1352 = vrsqrt.pop %v1350
        %v1353 = vmul.f32 %v1352, %v1350
        %v1354 = vmul.f32 %v1353, %v1352
        %v1355 = vmul.f32 0.5, %v1354
        %v1356 = vsub.f32 1.5, %v1355
        %v1357 = vmul.f32 %v1352, %v1356
        %vm1358 = vweird.f32 %v1350
        %vm1359 = vweird.f32 %v1352
        %vm1360 = vmor %vm1358, %vm1359
        %v1361 = vsel %vm1360, %v1352, %v1357
        %v1362 = vrsqrt.pop %v1351
        %v1363 = vmul.f32 %v1362, %v1351
        %v1364 = vmul.f32 %v1363, %v1362
        %v1365 = vmul.f32 0.5, %v1364
        %v1366 = vsub.f32 1.5, %v1365
        %v1367 = vmul.f32 %v1362, %v1366
        %vm1368 = vweird.f32 %v1351
        %vm1369 = vweird.f32 %v1362
        %vm1370 = vmor %vm1368, %vm1369
        %v1371 = vsel %vm1370, %v1362, %v1367
        %v1372 = vmul.f32 %v1338, %v1361
        %v1373 = vmul.f32 %v1339, %v1371
        %v1374 = vperm.slane %v1322, 0
        %v1375 = vmul.f32 %v1372, %v1374
        %v1376 = vmul.f32 %v1373, %v1374
        %v1377 = vperm.slane %v1322, 1
        %v1378 = vadd.f32 %v1375, %v1377
        %v1379 = vadd.f32 %v1376, %v1377
        %v1381 = vperm.slane %v1329, 0
        %v1384 = vsel %vm466, %v1378, 0
        %v1387 = vsel %vm466, %v1379, 0
        %1389 = vmatpush.msra.mxu0 0.0
        %1390 = vmatpush.msra.mxu0 0.0
        %1391 = vmatpush.msra.mxu0 0.0
        %1392 = vmatpush.msra.mxu0 0.0
        %1393 = vmatpush.msra.mxu0 0.0
        %1394 = vmatpush.msra.mxu0 0.0
        %1395 = vmatpush.msra.mxu0 0.0
        %1396 = vmatpush.msra.mxu0 0.0
        %1397 = vmatpush.msra.mxu0 0.0
        %1398 = vmatpush.msra.mxu0 0.0
        %1399 = vmatpush.msra.mxu0 0.0
        %1400 = vmatpush.msra.mxu0 0.0
        %1401 = vmatpush.msra.mxu0 %v1327
        %1402 = vmatpush.msra.mxu0 %v1326
        %1403 = vmatpush.msra.mxu0 %v1325
        %1404 = vmatpush.msra.mxu0 %v1324
        %1405 = vmatmul.f32.gmra.mxu0 %v1384
        %v1406 = vpop.f32.mrf.mxu0
        %v1407 = vadd.f32 %v1381, %v1406
        %1408 = vmatmul.f32.gmra.mxu0 %v1387
        %v1409 = vpop.f32.mrf.mxu0
        %v1410 = vadd.f32 %v1381, %v1409
        %1411 = vdwg.mxu0
        %1412 = vrot.lane.b32.xlu0 %v1381, 32
        %v1413 = vpop.permute.xlu0 %1412
        %v1415 = vadd.f32 %v1319, %v1413
        %v1416 = vadd.f32 %v1320, %v1413
        %1419 = vrot.lane.b32.xlu0 %v1407, 96
        %v1420 = vpop.permute.xlu0 %1419
        %1421 = vrot.lane.b32.xlu0 %v1410, 96
        %v1422 = vpop.permute.xlu0 %1421
        %v1423 = vsel %vm567, %v1407, 0
        %v1425 = vsel %vm567, %v1410, 0
        %v1427 = vsel %vm567, %v1420, 0
        %v1429 = vsel %vm567, %v1422, 0
        %1431 = vmatpush.xpose.msra.mxu0 0.0
        %1432 = vmatpush.xpose.msra.mxu0 0.0
        %1433 = vmatpush.xpose.msra.mxu0 0.0
        %1434 = vmatpush.xpose.msra.mxu0 0.0
        %1435 = vmatpush.xpose.msra.mxu0 0.0
        %1436 = vmatpush.xpose.msra.mxu0 0.0
        %1437 = vmatpush.xpose.msra.mxu0 0.0
        %1438 = vmatpush.xpose.msra.mxu0 0.0
        %1439 = vmatpush.xpose.msra.mxu0 0.0
        %1440 = vmatpush.xpose.msra.mxu0 0.0
        %1441 = vmatpush.xpose.msra.mxu0 0.0
        %1442 = vmatpush.xpose.msra.mxu0 0.0
        %1443 = vmatpush.xpose.msra.mxu0 0.0
        %1444 = vmatpush.xpose.msra.mxu0 0.0
        %1445 = vmatpush.xpose.msra.mxu0 %v1429
        %1446 = vmatpush.xpose.msra.mxu0 %v1427
        %1447 = vmatmul.f32.gmra.mxu0 %v1423
        %v1448 = vpop.f32.mrf.mxu0
        %v1449 = vadd.f32 0.0, %v1448
        %1450 = vmatmul.f32.gmra.mxu0 %v1425
        %v1451 = vpop.f32.mrf.mxu0
        %v1452 = vadd.f32 0.0, %v1451
        %1453 = vdwg.mxu0
        %v1454 = vsel %vm599, %v1449, -inf
        %1455 = vmax.xlane.f32.xlu0 %v1454
        %v1456 = vpop.xlane.xlu0 %1455
        %v1457 = vsel %vm599, %v1452, -inf
        %1458 = vmax.xlane.f32.xlu0 %v1457
        %v1459 = vpop.xlane.xlu0 %1458
        %v1460 = vsub.f32 %v1449, %v1456
        %v1461 = vsub.f32 %v1452, %v1459
        %v1462 = vmul.f32 %v1460, 1.442695
        %v1463 = vpow.pop %v1462
        %v1464 = vmul.f32 %v1461, 1.442695
        %v1465 = vpow.pop %v1464
        %v1466 = vsel %vm599, %v1463, 0.0
        %1467 = vadd.xlane.f32.xlu0 %v1466
        %v1468 = vpop.xlane.xlu0 %1467
        %v1469 = vsel %vm599, %v1465, 0.0
        %1470 = vadd.xlane.f32.xlu0 %v1469
        %v1471 = vpop.xlane.xlu0 %1470
        %v1472 = vrcp.pop %v1468
        %v1473 = vmul.f32 %v1468, %v1472
        %v1474 = vsub.f32 1.0, %v1473
        %v1475 = vmul.f32 %v1472, %v1474
        %v1476 = vadd.f32 %v1472, %v1475
        %vm1477 = vweird.f32 %v1468
        %vm1478 = vweird.f32 %v1472
        %vm1479 = vmor %vm1477, %vm1478
        %v1480 = vsel %vm1479, %v1472, %v1476
        %v1481 = vand.u32 2147483647, %v1468
        %vm1482 = vcmp.eq.f32.partialorder %v1481, 8.507059e+37
        %v1483 = vand.u32 %v1468, 2147483648
        %v1484 = vor.u32 1.1754944e-38, %v1483
        %v1485 = vsel %vm1482, %v1484, %v1480
        %v1486 = vmul.f32 %v1463, %v1485
        %v1487 = vrcp.pop %v1471
        %v1488 = vmul.f32 %v1471, %v1487
        %v1489 = vsub.f32 1.0, %v1488
        %v1490 = vmul.f32 %v1487, %v1489
        %v1491 = vadd.f32 %v1487, %v1490
        %vm1492 = vweird.f32 %v1471
        %vm1493 = vweird.f32 %v1487
        %vm1494 = vmor %vm1492, %vm1493
        %v1495 = vsel %vm1494, %v1487, %v1491
        %v1496 = vand.u32 2147483647, %v1471
        %vm1497 = vcmp.eq.f32.partialorder %v1496, 8.507059e+37
        %v1498 = vand.u32 %v1471, 2147483648
        %v1499 = vor.u32 1.1754944e-38, %v1498
        %v1500 = vsel %vm1497, %v1499, %v1495
        %v1501 = vmul.f32 %v1465, %v1500
        %1502 = vrot.lane.b32.xlu0 %v1407, 64
        %v1503 = vpop.permute.xlu0 %1502
        %1504 = vrot.lane.b32.xlu0 %v1410, 64
        %v1505 = vpop.permute.xlu0 %1504
        %v1509 = vsel %vm599, %v1486, 0
        %v1512 = vsel %vm599, %v1501, 0
        %1514 = vmatpush.msra.mxu0 0.0
        %1515 = vmatpush.msra.mxu0 0.0
        %1516 = vmatpush.msra.mxu0 0.0
        %1517 = vmatpush.msra.mxu0 0.0
        %1518 = vmatpush.msra.mxu0 0.0
        %1519 = vmatpush.msra.mxu0 0.0
        %1520 = vmatpush.msra.mxu0 0.0
        %1521 = vmatpush.msra.mxu0 0.0
        %1522 = vmatpush.msra.mxu0 0.0
        %1523 = vmatpush.msra.mxu0 0.0
        %1524 = vmatpush.msra.mxu0 0.0
        %1525 = vmatpush.msra.mxu0 0.0
        %1526 = vmatpush.msra.mxu0 0.0
        %1527 = vmatpush.msra.mxu0 0.0
        %1528 = vmatpush.msra.mxu0 %v1505
        %1529 = vmatpush.msra.mxu0 %v1503
        %1530 = vmatmul.f32.gmra.mxu0 %v1509
        %v1531 = vpop.f32.mrf.mxu0
        %v1532 = vadd.f32 0.0, %v1531
        %1533 = vmatmul.f32.gmra.mxu0 %v1512
        %v1534 = vpop.f32.mrf.mxu0
        %v1535 = vadd.f32 0.0, %v1534
        %1536 = vdwg.mxu0
        %1538 = vrot.lane.b32.xlu0 %v1324, 32
        %v1539 = vpop.permute.xlu0 %1538
        %v1542 = vsel %vm567, %v1532, 0
        %v1545 = vsel %vm567, %v1535, 0
        %1547 = vmatpush.msra.mxu0 0.0
        %1548 = vmatpush.msra.mxu0 0.0
        %1549 = vmatpush.msra.mxu0 0.0
        %1550 = vmatpush.msra.mxu0 0.0
        %1551 = vmatpush.msra.mxu0 0.0
        %1552 = vmatpush.msra.mxu0 0.0
        %1553 = vmatpush.msra.mxu0 0.0
        %1554 = vmatpush.msra.mxu0 0.0
        %1555 = vmatpush.msra.mxu0 0.0
        %1556 = vmatpush.msra.mxu0 0.0
        %1557 = vmatpush.msra.mxu0 0.0
        %1558 = vmatpush.msra.mxu0 0.0
        %1559 = vmatpush.msra.mxu0 0.0
        %1560 = vmatpush.msra.mxu0 0.0
        %1561 = vmatpush.msra.mxu0 0.0
        %1562 = vmatpush.msra.mxu0 %v1539
        %1563 = vmatmul.f32.gmra.mxu0 %v1542
        %v1564 = vpop.f32.mrf.mxu0
        %v1565 = vadd.f32 0.0, %v1564
        %1566 = vmatmul.f32.gmra.mxu0 %v1545
        %v1567 = vpop.f32.mrf.mxu0
        %v1568 = vadd.f32 0.0, %v1567
        %1569 = vdwg.mxu0
        %v1570 = vadd.f32 %v1415, %v1565
        %v1571 = vadd.f32 %v1416, %v1568
        %1572 = vrot.lane.b32.xlu0 %v1407, 120
        %v1573 = vpop.permute.xlu0 %1572
        %1574 = vrot.lane.b32.xlu0 %v1410, 120
        %v1575 = vpop.permute.xlu0 %1574
        %1576 = vrot.lane.b32.xlu0 %v1407, 88
        %v1577 = vpop.permute.xlu0 %1576
        %1578 = vrot.lane.b32.xlu0 %v1410, 88
        %v1579 = vpop.permute.xlu0 %1578
        %v1580 = vsel %vm567, %v1573, 0
        %v1582 = vsel %vm567, %v1575, 0
        %v1584 = vsel %vm567, %v1577, 0
        %v1586 = vsel %vm567, %v1579, 0
        %1588 = vmatpush.xpose.msra.mxu0 0.0
        %1589 = vmatpush.xpose.msra.mxu0 0.0
        %1590 = vmatpush.xpose.msra.mxu0 0.0
        %1591 = vmatpush.xpose.msra.mxu0 0.0
        %1592 = vmatpush.xpose.msra.mxu0 0.0
        %1593 = vmatpush.xpose.msra.mxu0 0.0
        %1594 = vmatpush.xpose.msra.mxu0 0.0
        %1595 = vmatpush.xpose.msra.mxu0 0.0
        %1596 = vmatpush.xpose.msra.mxu0 0.0
        %1597 = vmatpush.xpose.msra.mxu0 0.0
        %1598 = vmatpush.xpose.msra.mxu0 0.0
        %1599 = vmatpush.xpose.msra.mxu0 0.0
        %1600 = vmatpush.xpose.msra.mxu0 0.0
        %1601 = vmatpush.xpose.msra.mxu0 0.0
        %1602 = vmatpush.xpose.msra.mxu0 %v1586
        %1603 = vmatpush.xpose.msra.mxu0 %v1584
        %1604 = vmatmul.f32.gmra.mxu0 %v1580
        %v1605 = vpop.f32.mrf.mxu0
        %v1606 = vadd.f32 0.0, %v1605
        %1607 = vmatmul.f32.gmra.mxu0 %v1582
        %v1608 = vpop.f32.mrf.mxu0
        %v1609 = vadd.f32 0.0, %v1608
        %1610 = vdwg.mxu0
        %v1611 = vsel %vm599, %v1606, -inf
        %1612 = vmax.xlane.f32.xlu0 %v1611
        %v1613 = vpop.xlane.xlu0 %1612
        %v1614 = vsel %vm599, %v1609, -inf
        %1615 = vmax.xlane.f32.xlu0 %v1614
        %v1616 = vpop.xlane.xlu0 %1615
        %v1617 = vsub.f32 %v1606, %v1613
        %v1618 = vsub.f32 %v1609, %v1616
        %v1619 = vmul.f32 %v1617, 1.442695
        %v1620 = vpow.pop %v1619
        %v1621 = vmul.f32 %v1618, 1.442695
        %v1622 = vpow.pop %v1621
        %v1623 = vsel %vm599, %v1620, 0.0
        %1624 = vadd.xlane.f32.xlu0 %v1623
        %v1625 = vpop.xlane.xlu0 %1624
        %v1626 = vsel %vm599, %v1622, 0.0
        %1627 = vadd.xlane.f32.xlu0 %v1626
        %v1628 = vpop.xlane.xlu0 %1627
        %v1629 = vrcp.pop %v1625
        %v1630 = vmul.f32 %v1625, %v1629
        %v1631 = vsub.f32 1.0, %v1630
        %v1632 = vmul.f32 %v1629, %v1631
        %v1633 = vadd.f32 %v1629, %v1632
        %vm1634 = vweird.f32 %v1625
        %vm1635 = vweird.f32 %v1629
        %vm1636 = vmor %vm1634, %vm1635
        %v1637 = vsel %vm1636, %v1629, %v1633
        %v1638 = vand.u32 2147483647, %v1625
        %vm1639 = vcmp.eq.f32.partialorder %v1638, 8.507059e+37
        %v1640 = vand.u32 %v1625, 2147483648
        %v1641 = vor.u32 1.1754944e-38, %v1640
        %v1642 = vsel %vm1639, %v1641, %v1637
        %v1643 = vmul.f32 %v1620, %v1642
        %v1644 = vrcp.pop %v1628
        %v1645 = vmul.f32 %v1628, %v1644
        %v1646 = vsub.f32 1.0, %v1645
        %v1647 = vmul.f32 %v1644, %v1646
        %v1648 = vadd.f32 %v1644, %v1647
        %vm1649 = vweird.f32 %v1628
        %vm1650 = vweird.f32 %v1644
        %vm1651 = vmor %vm1649, %vm1650
        %v1652 = vsel %vm1651, %v1644, %v1648
        %v1653 = vand.u32 2147483647, %v1628
        %vm1654 = vcmp.eq.f32.partialorder %v1653, 8.507059e+37
        %v1655 = vand.u32 %v1628, 2147483648
        %v1656 = vor.u32 1.1754944e-38, %v1655
        %v1657 = vsel %vm1654, %v1656, %v1652
        %v1658 = vmul.f32 %v1622, %v1657
        %1659 = vrot.lane.b32.xlu0 %v1407, 56
        %v1660 = vpop.permute.xlu0 %1659
        %1661 = vrot.lane.b32.xlu0 %v1410, 56
        %v1662 = vpop.permute.xlu0 %1661
        %v1666 = vsel %vm599, %v1643, 0
        %v1669 = vsel %vm599, %v1658, 0
        %1671 = vmatpush.msra.mxu0 0.0
        %1672 = vmatpush.msra.mxu0 0.0
        %1673 = vmatpush.msra.mxu0 0.0
        %1674 = vmatpush.msra.mxu0 0.0
        %1675 = vmatpush.msra.mxu0 0.0
        %1676 = vmatpush.msra.mxu0 0.0
        %1677 = vmatpush.msra.mxu0 0.0
        %1678 = vmatpush.msra.mxu0 0.0
        %1679 = vmatpush.msra.mxu0 0.0
        %1680 = vmatpush.msra.mxu0 0.0
        %1681 = vmatpush.msra.mxu0 0.0
        %1682 = vmatpush.msra.mxu0 0.0
        %1683 = vmatpush.msra.mxu0 0.0
        %1684 = vmatpush.msra.mxu0 0.0
        %1685 = vmatpush.msra.mxu0 %v1662
        %1686 = vmatpush.msra.mxu0 %v1660
        %1687 = vmatmul.f32.gmra.mxu0 %v1666
        %v1688 = vpop.f32.mrf.mxu0
        %v1689 = vadd.f32 0.0, %v1688
        %1690 = vmatmul.f32.gmra.mxu0 %v1669
        %v1691 = vpop.f32.mrf.mxu0
        %v1692 = vadd.f32 0.0, %v1691
        %1693 = vdwg.mxu0
        %1695 = vrot.lane.b32.xlu0 %v1325, 32
        %v1696 = vpop.permute.xlu0 %1695
        %v1699 = vsel %vm567, %v1689, 0
        %v1702 = vsel %vm567, %v1692, 0
        %1704 = vmatpush.msra.mxu0 0.0
        %1705 = vmatpush.msra.mxu0 0.0
        %1706 = vmatpush.msra.mxu0 0.0
        %1707 = vmatpush.msra.mxu0 0.0
        %1708 = vmatpush.msra.mxu0 0.0
        %1709 = vmatpush.msra.mxu0 0.0
        %1710 = vmatpush.msra.mxu0 0.0
        %1711 = vmatpush.msra.mxu0 0.0
        %1712 = vmatpush.msra.mxu0 0.0
        %1713 = vmatpush.msra.mxu0 0.0
        %1714 = vmatpush.msra.mxu0 0.0
        %1715 = vmatpush.msra.mxu0 0.0
        %1716 = vmatpush.msra.mxu0 0.0
        %1717 = vmatpush.msra.mxu0 0.0
        %1718 = vmatpush.msra.mxu0 0.0
        %1719 = vmatpush.msra.mxu0 %v1696
        %1720 = vmatmul.f32.gmra.mxu0 %v1699
        %v1721 = vpop.f32.mrf.mxu0
        %v1722 = vadd.f32 0.0, %v1721
        %1723 = vmatmul.f32.gmra.mxu0 %v1702
        %v1724 = vpop.f32.mrf.mxu0
        %v1725 = vadd.f32 0.0, %v1724
        %1726 = vdwg.mxu0
        %v1727 = vadd.f32 %v1570, %v1722
        %v1728 = vadd.f32 %v1571, %v1725
        %1729 = vrot.lane.b32.xlu0 %v1407, 112
        %v1730 = vpop.permute.xlu0 %1729
        %1731 = vrot.lane.b32.xlu0 %v1410, 112
        %v1732 = vpop.permute.xlu0 %1731
        %1733 = vrot.lane.b32.xlu0 %v1407, 80
        %v1734 = vpop.permute.xlu0 %1733
        %1735 = vrot.lane.b32.xlu0 %v1410, 80
        %v1736 = vpop.permute.xlu0 %1735
        %v1737 = vsel %vm567, %v1730, 0
        %v1739 = vsel %vm567, %v1732, 0
        %v1741 = vsel %vm567, %v1734, 0
        %v1743 = vsel %vm567, %v1736, 0
        %1745 = vmatpush.xpose.msra.mxu0 0.0
        %1746 = vmatpush.xpose.msra.mxu0 0.0
        %1747 = vmatpush.xpose.msra.mxu0 0.0
        %1748 = vmatpush.xpose.msra.mxu0 0.0
        %1749 = vmatpush.xpose.msra.mxu0 0.0
        %1750 = vmatpush.xpose.msra.mxu0 0.0
        %1751 = vmatpush.xpose.msra.mxu0 0.0
        %1752 = vmatpush.xpose.msra.mxu0 0.0
        %1753 = vmatpush.xpose.msra.mxu0 0.0
        %1754 = vmatpush.xpose.msra.mxu0 0.0
        %1755 = vmatpush.xpose.msra.mxu0 0.0
        %1756 = vmatpush.xpose.msra.mxu0 0.0
        %1757 = vmatpush.xpose.msra.mxu0 0.0
        %1758 = vmatpush.xpose.msra.mxu0 0.0
        %1759 = vmatpush.xpose.msra.mxu0 %v1743
        %1760 = vmatpush.xpose.msra.mxu0 %v1741
        %1761 = vmatmul.f32.gmra.mxu0 %v1737
        %v1762 = vpop.f32.mrf.mxu0
        %v1763 = vadd.f32 0.0, %v1762
        %1764 = vmatmul.f32.gmra.mxu0 %v1739
        %v1765 = vpop.f32.mrf.mxu0
        %v1766 = vadd.f32 0.0, %v1765
        %1767 = vdwg.mxu0
        %v1768 = vsel %vm599, %v1763, -inf
        %1769 = vmax.xlane.f32.xlu0 %v1768
        %v1770 = vpop.xlane.xlu0 %1769
        %v1771 = vsel %vm599, %v1766, -inf
        %1772 = vmax.xlane.f32.xlu0 %v1771
        %v1773 = vpop.xlane.xlu0 %1772
        %v1774 = vsub.f32 %v1763, %v1770
        %v1775 = vsub.f32 %v1766, %v1773
        %v1776 = vmul.f32 %v1774, 1.442695
        %v1777 = vpow.pop %v1776
        %v1778 = vmul.f32 %v1775, 1.442695
        %v1779 = vpow.pop %v1778
        %v1780 = vsel %vm599, %v1777, 0.0
        %1781 = vadd.xlane.f32.xlu0 %v1780
        %v1782 = vpop.xlane.xlu0 %1781
        %v1783 = vsel %vm599, %v1779, 0.0
        %1784 = vadd.xlane.f32.xlu0 %v1783
        %v1785 = vpop.xlane.xlu0 %1784
        %v1786 = vrcp.pop %v1782
        %v1787 = vmul.f32 %v1782, %v1786
        %v1788 = vsub.f32 1.0, %v1787
        %v1789 = vmul.f32 %v1786, %v1788
        %v1790 = vadd.f32 %v1786, %v1789
        %vm1791 = vweird.f32 %v1782
        %vm1792 = vweird.f32 %v1786
        %vm1793 = vmor %vm1791, %vm1792
        %v1794 = vsel %vm1793, %v1786, %v1790
        %v1795 = vand.u32 2147483647, %v1782
        %vm1796 = vcmp.eq.f32.partialorder %v1795, 8.507059e+37
        %v1797 = vand.u32 %v1782, 2147483648
        %v1798 = vor.u32 1.1754944e-38, %v1797
        %v1799 = vsel %vm1796, %v1798, %v1794
        %v1800 = vmul.f32 %v1777, %v1799
        %v1801 = vrcp.pop %v1785
        %v1802 = vmul.f32 %v1785, %v1801
        %v1803 = vsub.f32 1.0, %v1802
        %v1804 = vmul.f32 %v1801, %v1803
        %v1805 = vadd.f32 %v1801, %v1804
        %vm1806 = vweird.f32 %v1785
        %vm1807 = vweird.f32 %v1801
        %vm1808 = vmor %vm1806, %vm1807
        %v1809 = vsel %vm1808, %v1801, %v1805
        %v1810 = vand.u32 2147483647, %v1785
        %vm1811 = vcmp.eq.f32.partialorder %v1810, 8.507059e+37
        %v1812 = vand.u32 %v1785, 2147483648
        %v1813 = vor.u32 1.1754944e-38, %v1812
        %v1814 = vsel %vm1811, %v1813, %v1809
        %v1815 = vmul.f32 %v1779, %v1814
        %1816 = vrot.lane.b32.xlu0 %v1407, 48
        %v1817 = vpop.permute.xlu0 %1816
        %1818 = vrot.lane.b32.xlu0 %v1410, 48
        %v1819 = vpop.permute.xlu0 %1818
        %v1823 = vsel %vm599, %v1800, 0
        %v1826 = vsel %vm599, %v1815, 0
        %1828 = vmatpush.msra.mxu0 0.0
        %1829 = vmatpush.msra.mxu0 0.0
        %1830 = vmatpush.msra.mxu0 0.0
        %1831 = vmatpush.msra.mxu0 0.0
        %1832 = vmatpush.msra.mxu0 0.0
        %1833 = vmatpush.msra.mxu0 0.0
        %1834 = vmatpush.msra.mxu0 0.0
        %1835 = vmatpush.msra.mxu0 0.0
        %1836 = vmatpush.msra.mxu0 0.0
        %1837 = vmatpush.msra.mxu0 0.0
        %1838 = vmatpush.msra.mxu0 0.0
        %1839 = vmatpush.msra.mxu0 0.0
        %1840 = vmatpush.msra.mxu0 0.0
        %1841 = vmatpush.msra.mxu0 0.0
        %1842 = vmatpush.msra.mxu0 %v1819
        %1843 = vmatpush.msra.mxu0 %v1817
        %1844 = vmatmul.f32.gmra.mxu0 %v1823
        %v1845 = vpop.f32.mrf.mxu0
        %v1846 = vadd.f32 0.0, %v1845
        %1847 = vmatmul.f32.gmra.mxu0 %v1826
        %v1848 = vpop.f32.mrf.mxu0
        %v1849 = vadd.f32 0.0, %v1848
        %1850 = vdwg.mxu0
        %1852 = vrot.lane.b32.xlu0 %v1326, 32
        %v1853 = vpop.permute.xlu0 %1852
        %v1856 = vsel %vm567, %v1846, 0
        %v1859 = vsel %vm567, %v1849, 0
        %1861 = vmatpush.msra.mxu0 0.0
        %1862 = vmatpush.msra.mxu0 0.0
        %1863 = vmatpush.msra.mxu0 0.0
        %1864 = vmatpush.msra.mxu0 0.0
        %1865 = vmatpush.msra.mxu0 0.0
        %1866 = vmatpush.msra.mxu0 0.0
        %1867 = vmatpush.msra.mxu0 0.0
        %1868 = vmatpush.msra.mxu0 0.0
        %1869 = vmatpush.msra.mxu0 0.0
        %1870 = vmatpush.msra.mxu0 0.0
        %1871 = vmatpush.msra.mxu0 0.0
        %1872 = vmatpush.msra.mxu0 0.0
        %1873 = vmatpush.msra.mxu0 0.0
        %1874 = vmatpush.msra.mxu0 0.0
        %1875 = vmatpush.msra.mxu0 0.0
        %1876 = vmatpush.msra.mxu0 %v1853
        %1877 = vmatmul.f32.gmra.mxu0 %v1856
        %v1878 = vpop.f32.mrf.mxu0
        %v1879 = vadd.f32 0.0, %v1878
        %1880 = vmatmul.f32.gmra.mxu0 %v1859
        %v1881 = vpop.f32.mrf.mxu0
        %v1882 = vadd.f32 0.0, %v1881
        %1883 = vdwg.mxu0
        %v1884 = vadd.f32 %v1727, %v1879
        %v1885 = vadd.f32 %v1728, %v1882
        %1886 = vrot.lane.b32.xlu0 %v1407, 104
        %v1887 = vpop.permute.xlu0 %1886
        %1888 = vrot.lane.b32.xlu0 %v1410, 104
        %v1889 = vpop.permute.xlu0 %1888
        %1890 = vrot.lane.b32.xlu0 %v1407, 72
        %v1891 = vpop.permute.xlu0 %1890
        %1892 = vrot.lane.b32.xlu0 %v1410, 72
        %v1893 = vpop.permute.xlu0 %1892
        %v1894 = vsel %vm567, %v1887, 0
        %v1896 = vsel %vm567, %v1889, 0
        %v1898 = vsel %vm567, %v1891, 0
        %v1900 = vsel %vm567, %v1893, 0
        %1902 = vmatpush.xpose.msra.mxu0 0.0
        %1903 = vmatpush.xpose.msra.mxu0 0.0
        %1904 = vmatpush.xpose.msra.mxu0 0.0
        %1905 = vmatpush.xpose.msra.mxu0 0.0
        %1906 = vmatpush.xpose.msra.mxu0 0.0
        %1907 = vmatpush.xpose.msra.mxu0 0.0
        %1908 = vmatpush.xpose.msra.mxu0 0.0
        %1909 = vmatpush.xpose.msra.mxu0 0.0
        %1910 = vmatpush.xpose.msra.mxu0 0.0
        %1911 = vmatpush.xpose.msra.mxu0 0.0
        %1912 = vmatpush.xpose.msra.mxu0 0.0
        %1913 = vmatpush.xpose.msra.mxu0 0.0
        %1914 = vmatpush.xpose.msra.mxu0 0.0
        %1915 = vmatpush.xpose.msra.mxu0 0.0
        %1916 = vmatpush.xpose.msra.mxu0 %v1900
        %1917 = vmatpush.xpose.msra.mxu0 %v1898
        %1918 = vmatmul.f32.gmra.mxu0 %v1894
        %v1919 = vpop.f32.mrf.mxu0
        %v1920 = vadd.f32 0.0, %v1919
        %1921 = vmatmul.f32.gmra.mxu0 %v1896
        %v1922 = vpop.f32.mrf.mxu0
        %v1923 = vadd.f32 0.0, %v1922
        %1924 = vdwg.mxu0
        %v1925 = vsel %vm599, %v1920, -inf
        %1926 = vmax.xlane.f32.xlu0 %v1925
        %v1927 = vpop.xlane.xlu0 %1926
        %v1928 = vsel %vm599, %v1923, -inf
        %1929 = vmax.xlane.f32.xlu0 %v1928
        %v1930 = vpop.xlane.xlu0 %1929
        %v1931 = vsub.f32 %v1920, %v1927
        %v1932 = vsub.f32 %v1923, %v1930
        %v1933 = vmul.f32 %v1931, 1.442695
        %v1934 = vpow.pop %v1933
        %v1935 = vmul.f32 %v1932, 1.442695
        %v1936 = vpow.pop %v1935
        %v1937 = vsel %vm599, %v1934, 0.0
        %1938 = vadd.xlane.f32.xlu0 %v1937
        %v1939 = vpop.xlane.xlu0 %1938
        %v1940 = vsel %vm599, %v1936, 0.0
        %1941 = vadd.xlane.f32.xlu0 %v1940
        %v1942 = vpop.xlane.xlu0 %1941
        %v1943 = vrcp.pop %v1939
        %v1944 = vmul.f32 %v1939, %v1943
        %v1945 = vsub.f32 1.0, %v1944
        %v1946 = vmul.f32 %v1943, %v1945
        %v1947 = vadd.f32 %v1943, %v1946
        %vm1948 = vweird.f32 %v1939
        %vm1949 = vweird.f32 %v1943
        %vm1950 = vmor %vm1948, %vm1949
        %v1951 = vsel %vm1950, %v1943, %v1947
        %v1952 = vand.u32 2147483647, %v1939
        %vm1953 = vcmp.eq.f32.partialorder %v1952, 8.507059e+37
        %v1954 = vand.u32 %v1939, 2147483648
        %v1955 = vor.u32 1.1754944e-38, %v1954
        %v1956 = vsel %vm1953, %v1955, %v1951
        %v1957 = vmul.f32 %v1934, %v1956
        %v1958 = vrcp.pop %v1942
        %v1959 = vmul.f32 %v1942, %v1958
        %v1960 = vsub.f32 1.0, %v1959
        %v1961 = vmul.f32 %v1958, %v1960
        %v1962 = vadd.f32 %v1958, %v1961
        %vm1963 = vweird.f32 %v1942
        %vm1964 = vweird.f32 %v1958
        %vm1965 = vmor %vm1963, %vm1964
        %v1966 = vsel %vm1965, %v1958, %v1962
        %v1967 = vand.u32 2147483647, %v1942
        %vm1968 = vcmp.eq.f32.partialorder %v1967, 8.507059e+37
        %v1969 = vand.u32 %v1942, 2147483648
        %v1970 = vor.u32 1.1754944e-38, %v1969
        %v1971 = vsel %vm1968, %v1970, %v1966
        %v1972 = vmul.f32 %v1936, %v1971
        %1973 = vrot.lane.b32.xlu0 %v1407, 40
        %v1974 = vpop.permute.xlu0 %1973
        %1975 = vrot.lane.b32.xlu0 %v1410, 40
        %v1976 = vpop.permute.xlu0 %1975
        %v1980 = vsel %vm599, %v1957, 0
        %v1983 = vsel %vm599, %v1972, 0
        %1985 = vmatpush.msra.mxu0 0.0
        %1986 = vmatpush.msra.mxu0 0.0
        %1987 = vmatpush.msra.mxu0 0.0
        %1988 = vmatpush.msra.mxu0 0.0
        %1989 = vmatpush.msra.mxu0 0.0
        %1990 = vmatpush.msra.mxu0 0.0
        %1991 = vmatpush.msra.mxu0 0.0
        %1992 = vmatpush.msra.mxu0 0.0
        %1993 = vmatpush.msra.mxu0 0.0
        %1994 = vmatpush.msra.mxu0 0.0
        %1995 = vmatpush.msra.mxu0 0.0
        %1996 = vmatpush.msra.mxu0 0.0
        %1997 = vmatpush.msra.mxu0 0.0
        %1998 = vmatpush.msra.mxu0 0.0
        %1999 = vmatpush.msra.mxu0 %v1976
        %2000 = vmatpush.msra.mxu0 %v1974
        %2001 = vmatmul.f32.gmra.mxu0 %v1980
        %v2002 = vpop.f32.mrf.mxu0
        %v2003 = vadd.f32 0.0, %v2002
        %2004 = vmatmul.f32.gmra.mxu0 %v1983
        %v2005 = vpop.f32.mrf.mxu0
        %v2006 = vadd.f32 0.0, %v2005
        %2007 = vdwg.mxu0
        %2009 = vrot.lane.b32.xlu0 %v1327, 32
        %v2010 = vpop.permute.xlu0 %2009
        %v2013 = vsel %vm567, %v2003, 0
        %v2016 = vsel %vm567, %v2006, 0
        %2018 = vmatpush.msra.mxu0 0.0
        %2019 = vmatpush.msra.mxu0 0.0
        %2020 = vmatpush.msra.mxu0 0.0
        %2021 = vmatpush.msra.mxu0 0.0
        %2022 = vmatpush.msra.mxu0 0.0
        %2023 = vmatpush.msra.mxu0 0.0
        %2024 = vmatpush.msra.mxu0 0.0
        %2025 = vmatpush.msra.mxu0 0.0
        %2026 = vmatpush.msra.mxu0 0.0
        %2027 = vmatpush.msra.mxu0 0.0
        %2028 = vmatpush.msra.mxu0 0.0
        %2029 = vmatpush.msra.mxu0 0.0
        %2030 = vmatpush.msra.mxu0 0.0
        %2031 = vmatpush.msra.mxu0 0.0
        %2032 = vmatpush.msra.mxu0 0.0
        %2033 = vmatpush.msra.mxu0 %v2010
        %2034 = vmatmul.f32.gmra.mxu0 %v2013
        %v2035 = vpop.f32.mrf.mxu0
        %v2036 = vadd.f32 0.0, %v2035
        %2037 = vmatmul.f32.gmra.mxu0 %v2016
        %v2038 = vpop.f32.mrf.mxu0
        %v2039 = vadd.f32 0.0, %v2038
        %2040 = vdwg.mxu0
        %v2041 = vadd.f32 %v1884, %v2036
        %v2042 = vadd.f32 %v1885, %v2039
        %v2043 = vsel %vm466, %v2041, 0.0
        %2044 = vadd.xlane.f32.xlu0 %v2043
        %v2045 = vpop.xlane.xlu0 %2044
        %v2046 = vsel %vm466, %v2042, 0.0
        %2047 = vadd.xlane.f32.xlu0 %v2046
        %v2048 = vpop.xlane.xlu0 %2047
        %v2049 = vmul.f32 %v2045, %v479
        %v2050 = vmul.f32 %v2048, %v479
        %v2051 = vsub.f32 %v2041, %v2049
        %v2052 = vsub.f32 %v2042, %v2050
        %v2053 = vmul.f32 %v2051, %v2051
        %v2054 = vmul.f32 %v2052, %v2052
        %v2055 = vsel %vm466, %v2053, 0.0
        %2056 = vadd.xlane.f32.xlu0 %v2055
        %v2057 = vpop.xlane.xlu0 %2056
        %v2058 = vsel %vm466, %v2054, 0.0
        %2059 = vadd.xlane.f32.xlu0 %v2058
        %v2060 = vpop.xlane.xlu0 %2059
        %v2061 = vmul.f32 %v2057, %v479
        %v2062 = vmul.f32 %v2060, %v479
        %v2063 = vadd.f32 %v2061, 1e-06
        %v2064 = vadd.f32 %v2062, 1e-06
        %v2065 = vrsqrt.pop %v2063
        %v2066 = vmul.f32 %v2065, %v2063
        %v2067 = vmul.f32 %v2066, %v2065
        %v2068 = vmul.f32 0.5, %v2067
        %v2069 = vsub.f32 1.5, %v2068
        %v2070 = vmul.f32 %v2065, %v2069
        %vm2071 = vweird.f32 %v2063
        %vm2072 = vweird.f32 %v2065
        %vm2073 = vmor %vm2071, %vm2072
        %v2074 = vsel %vm2073, %v2065, %v2070
        %v2075 = vrsqrt.pop %v2064
        %v2076 = vmul.f32 %v2075, %v2064
        %v2077 = vmul.f32 %v2076, %v2075
        %v2078 = vmul.f32 0.5, %v2077
        %v2079 = vsub.f32 1.5, %v2078
        %v2080 = vmul.f32 %v2075, %v2079
        %vm2081 = vweird.f32 %v2064
        %vm2082 = vweird.f32 %v2075
        %vm2083 = vmor %vm2081, %vm2082
        %v2084 = vsel %vm2083, %v2075, %v2080
        %v2085 = vmul.f32 %v2051, %v2074
        %v2086 = vmul.f32 %v2052, %v2084
        %v2087 = vperm.slane %v1322, 2
        %v2088 = vmul.f32 %v2085, %v2087
        %v2089 = vmul.f32 %v2086, %v2087
        %v2090 = vperm.slane %v1322, 3
        %v2091 = vadd.f32 %v2088, %v2090
        %v2092 = vadd.f32 %v2089, %v2090
        %s2093 = scalar_lea.vmem %s7, 32
        %v2094 = vld [vmem:[%s2093] sm:$0xff]
        %v2095 = vld [vmem:[%s2093 + $0x8] sm:$0xff]
        %v2096 = vld [vmem:[%s2093 + $0x10] sm:$0xff]
        %v2097 = vld [vmem:[%s2093 + $0x18] sm:$0xff]
        %s2098 = scalar_lea.vmem %s8, 1
        %v2099 = vld [vmem:[%s2098] sm:$0x1]
        %v2101 = vperm.slane %v2099, 0
        %v2104 = vsel %vm466, %v2091, 0
        %v2107 = vsel %vm466, %v2092, 0
        %2109 = vmatpush.msra.mxu0 0.0
        %2110 = vmatpush.msra.mxu0 0.0
        %2111 = vmatpush.msra.mxu0 0.0
        %2112 = vmatpush.msra.mxu0 0.0
        %2113 = vmatpush.msra.mxu0 0.0
        %2114 = vmatpush.msra.mxu0 0.0
        %2115 = vmatpush.msra.mxu0 0.0
        %2116 = vmatpush.msra.mxu0 0.0
        %2117 = vmatpush.msra.mxu0 0.0
        %2118 = vmatpush.msra.mxu0 0.0
        %2119 = vmatpush.msra.mxu0 0.0
        %2120 = vmatpush.msra.mxu0 0.0
        %2121 = vmatpush.msra.mxu0 %v2097
        %2122 = vmatpush.msra.mxu0 %v2096
        %2123 = vmatpush.msra.mxu0 %v2095
        %2124 = vmatpush.msra.mxu0 %v2094
        %2125 = vmatmul.f32.gmra.mxu0 %v2104
        %v2126 = vpop.f32.mrf.mxu0
        %v2127 = vadd.f32 %v2101, %v2126
        %2128 = vmatmul.f32.gmra.mxu0 %v2107
        %v2129 = vpop.f32.mrf.mxu0
        %v2130 = vadd.f32 %v2101, %v2129
        %2131 = vdwg.mxu0
        %v2132 = vmax.f32 %v2127, 0.0
        %v2133 = vmax.f32 %v2130, 0.0
        %s2134 = scalar_lea.vmem %s9, 64
        %v2135 = vld [vmem:[%s2134] sm:$0xff]
        %v2136 = vld [vmem:[%s2134 + $0x8] sm:$0xff]
        %v2137 = vld [vmem:[%s2134 + $0x10] sm:$0xff]
        %v2138 = vld [vmem:[%s2134 + $0x18] sm:$0xff]
        %v2139 = vld [vmem:[%s2134 + $0x20] sm:$0xff]
        %v2140 = vld [vmem:[%s2134 + $0x28] sm:$0xff]
        %v2141 = vld [vmem:[%s2134 + $0x30] sm:$0xff]
        %v2142 = vld [vmem:[%s2134 + $0x38] sm:$0xff]
        %s2143 = scalar_lea.vmem %s10, 1
        %v2144 = vld [vmem:[%s2143] sm:$0x1]
        %v2146 = vperm.slane %v2144, 0
        %v2149 = vsel %vm426, %v2132, 0
        %v2152 = vsel %vm426, %v2133, 0
        %2154 = vmatpush.msra.mxu0 0.0
        %2155 = vmatpush.msra.mxu0 0.0
        %2156 = vmatpush.msra.mxu0 0.0
        %2157 = vmatpush.msra.mxu0 0.0
        %2158 = vmatpush.msra.mxu0 0.0
        %2159 = vmatpush.msra.mxu0 0.0
        %2160 = vmatpush.msra.mxu0 0.0
        %2161 = vmatpush.msra.mxu0 0.0
        %2162 = vmatpush.msra.mxu0 %v2142
        %2163 = vmatpush.msra.mxu0 %v2141
        %2164 = vmatpush.msra.mxu0 %v2140
        %2165 = vmatpush.msra.mxu0 %v2139
        %2166 = vmatpush.msra.mxu0 %v2138
        %2167 = vmatpush.msra.mxu0 %v2137
        %2168 = vmatpush.msra.mxu0 %v2136
        %2169 = vmatpush.msra.mxu0 %v2135
        %2170 = vmatmul.f32.gmra.mxu0 %v2149
        %v2171 = vpop.f32.mrf.mxu0
        %v2172 = vadd.f32 %v2146, %v2171
        %2173 = vmatmul.f32.gmra.mxu0 %v2152
        %v2174 = vpop.f32.mrf.mxu0
        %v2175 = vadd.f32 %v2146, %v2174
        %2176 = vdwg.mxu0
        %v2177 = vadd.f32 %v2172, %v2041
        %v2178 = vadd.f32 %v2175, %v2042
        %v2179 = vld [vmem:[%s11] sm:$0x1]
        %v2180 = vld [vmem:[%s11 + $0x1] sm:$0x1]
        %v2181 = vsel %vm466, %v2177, 0.0
        %2182 = vadd.xlane.f32.xlu0 %v2181
        %v2183 = vpop.xlane.xlu0 %2182
        %v2184 = vsel %vm466, %v2178, 0.0
        %2185 = vadd.xlane.f32.xlu0 %v2184
        %v2186 = vpop.xlane.xlu0 %2185
        %v2187 = vmul.f32 %v2183, %v479
        %v2188 = vmul.f32 %v2186, %v479
        %v2189 = vsub.f32 %v2177, %v2187
        %v2190 = vsub.f32 %v2178, %v2188
        %v2191 = vmul.f32 %v2189, %v2189
        %v2192 = vmul.f32 %v2190, %v2190
        %v2193 = vsel %vm466, %v2191, 0.0
        %2194 = vadd.xlane.f32.xlu0 %v2193
        %v2195 = vpop.xlane.xlu0 %2194
        %v2196 = vsel %vm466, %v2192, 0.0
        %2197 = vadd.xlane.f32.xlu0 %v2196
        %v2198 = vpop.xlane.xlu0 %2197
        %v2199 = vmul.f32 %v2195, %v479
        %v2200 = vmul.f32 %v2198, %v479
        %v2201 = vadd.f32 %v2199, 1e-06
        %v2202 = vadd.f32 %v2200, 1e-06
        %v2203 = vrsqrt.pop %v2201
        %v2204 = vmul.f32 %v2203, %v2201
        %v2205 = vmul.f32 %v2204, %v2203
        %v2206 = vmul.f32 0.5, %v2205
        %v2207 = vsub.f32 1.5, %v2206
        %v2208 = vmul.f32 %v2203, %v2207
        %vm2209 = vweird.f32 %v2201
        %vm2210 = vweird.f32 %v2203
        %vm2211 = vmor %vm2209, %vm2210
        %v2212 = vsel %vm2211, %v2203, %v2208
        %v2213 = vrsqrt.pop %v2202
        %v2214 = vmul.f32 %v2213, %v2202
        %v2215 = vmul.f32 %v2214, %v2213
        %v2216 = vmul.f32 0.5, %v2215
        %v2217 = vsub.f32 1.5, %v2216
        %v2218 = vmul.f32 %v2213, %v2217
        %vm2219 = vweird.f32 %v2202
        %vm2220 = vweird.f32 %v2213
        %vm2221 = vmor %vm2219, %vm2220
        %v2222 = vsel %vm2221, %v2213, %v2218
        %v2223 = vmul.f32 %v2189, %v2212
        %v2224 = vmul.f32 %v2190, %v2222
        %v2225 = vperm.slane %v2179, 0
        %v2226 = vmul.f32 %v2223, %v2225
        %v2227 = vmul.f32 %v2224, %v2225
        %v2228 = vperm.slane %v2180, 0
        %v2229 = vadd.f32 %v2226, %v2228
        %v2230 = vadd.f32 %v2227, %v2228
        %2231 = vst.msk [vmem:[%s406] sm:$0xff] %vm466, %v2229
        %2232 = vst.msk [vmem:[%s406 + $0x8] sm:$0xff] %vm466, %v2230
        %s2233 = sand.u32 %s291, 1
        %s2234 = scalar_lea.sflag [#allocation3], %s2233
        %s2235 = sand.u32 %s291, 1
        %s2236 = smul.addr %s2235, 16
        %s2237 = scalar_lea.vmem [#allocation2], %s2236
        // Predicated region
        $region69: #{tpu_custom_call.1} parent=67 // pred_check
          %p2238 = pneg %p301
        $region70: #{tpu_custom_call.1} parent=67 // pred_check_branch
          %2240 = sbr.rel (%p2238) target = $region72
        $region71: #{tpu_custom_call.1} parent=67 // pred_region
          %2242 = vsyncadd %s2234, 0
          %s2243 = smul.addr %s26, 2
          %s2244 = smul.addr %s2243, 8
          %s2245 = scalar_lea.hbm %s12, %s2244
          %s2246 = sshll.u32 %s2237, 4
          %s2247 = int_to_ptr.vmem [resolvable:$true] %s2246
          %s2248 = sshll.u32 %s2245, 4
          %s2249 = int_to_ptr.hbm [resolvable:$true] %s2248
          %2254 = dma.vmem_to_hbm [thread:$0]  %s2247, 256, %s2249, %s2234, 128, 128, 8
        $region72: #{tpu_custom_call.1} parent=67 // pred_fallthru
          _
      $region68: #{tpu_custom_call.1} parent=5 // pred_fallthru
        _
      %p2255 = scmp.le.s32.totalorder 2, %s21
      // Predicated region
      $region73: #{tpu_custom_call.1} parent=5 // pred_check
        %p2256 = pneg %p2255
      $region74: #{tpu_custom_call.1} parent=5 // pred_check_branch
        %2258 = sbr.rel (%p2256) target = $region76
      $region75: #{tpu_custom_call.1} parent=5 // pred_region
        %s2259 = ssub.s32 %s21, 2
        // Predicated region
        $region77: #{tpu_custom_call.1} parent=75 // pred_check
          %p2260 = pneg %p307
        $region78: #{tpu_custom_call.1} parent=75 // pred_check_branch
          %2262 = sbr.rel (%p2260) target = $region80
        $region79: #{tpu_custom_call.1} parent=75 // pred_region
          %s2263 = sand.u32 %s292, 1
          %s2264 = scalar_lea.sflag [#allocation3], %s2263
          %s2265 = sand.u32 %s292, 1
          %s2266 = smul.addr %s2265, 16
          %s2267 = scalar_lea.vmem [#allocation2], %s2266
          %2269 = dma.done %s2264, 256
        $region80: #{tpu_custom_call.1} parent=75 // pred_fallthru
          _
      $region76: #{tpu_custom_call.1} parent=5 // pred_fallthru
        _
    $region6: #{tpu_custom_call.1} parent=1 // loop_footer
      %s25 = sadd.s32 1, %s21
    $region7: #{tpu_custom_call.1} parent=1 // loop_footer_branch
      %20 = sbr.rel target = $region3
    $region8: #{tpu_custom_call.1} parent=1 // loop_exit
      _
    %2270 = vsyncpa [#allocation3], 1
    %s2271 = scalar_lea.sflag [#allocation3], 1
    %2272 = vsyncpa %s2271, 1

</llo_original>
